<compile_context>
chip_gen: v5e
topology: v5e:2x2
jax: 0.10.0
libtpu: 0.0.40
codegen_flags: <defaults>
</compile_context>

<pallas_src>
import math

import jax
import jax.numpy as jnp
import numpy as np
from jax import lax
from jax.experimental import pallas as pl
from jax.experimental.pallas import tpu as pltpu

NEG_PAD = float(-2 ** 32 + 1)


# --------------------------------------------------------------------------
# Kernel
# --------------------------------------------------------------------------
def _make_kernel(head_num: int, head_size: int, tq: int, lk: int, causal: bool):
    d = head_size

    def _body(q_ref, k_ref, v_ref, tmk_ref, tmv_ref, tmask_ref, amask_ref,
              o_ref, m_sc, l_sc, acc_sc):
        ki = pl.program_id(2)                      # kv tile (reduction axis)

        @pl.when(ki == 0)
        def _():
            m_sc[...] = jnp.full_like(m_sc, -jnp.inf)
            l_sc[...] = jnp.zeros_like(l_sc)
            acc_sc[...] = jnp.zeros_like(acc_sc)

        # masks: time_mask blanks whole query rows; attn mask is either
        # rebuilt from iota (causal) or a small streamed (tq, lk) block.
        row_masked = tmask_ref[0] > 0.0                             # (tq, 1)
        if causal:
            qi = pl.program_id(1)
            rows = qi * tq + lax.broadcasted_iota(jnp.int32, (tq, lk), 0)
            cols = ki * lk + lax.broadcasted_iota(jnp.int32, (tq, lk), 1)
            attn_masked = cols > rows                               # triu(k=1)
        else:
            attn_masked = amask_ref[...] > 0.0                      # (tq, lk)
        masked = jnp.logical_or(row_masked, attn_masked)            # (tq, lk)

        # Static loop over heads; every tensor is sliced at the *ref* level
        # (static slices = zero-cost views), so only one head's chunk of the
        # big bf16 tm tiles is loaded/upcast/live at a time.
        for h in range(head_num):
            lo = h * d
            q_h = q_ref[0, :, lo:lo + d]                 # (tq, d), pre-scaled
            k_h = k_ref[0, :, lo:lo + d]                 # (lk, d), K + posK
            v_h = v_ref[0, :, lo:lo + d]                 # (lk, d), V + posV
            tmk_h = tmk_ref[0, :, :, lo:lo + d].astype(jnp.float32)  # (tq,lk,d)

            # scores = Q (K+posK)^T + <tmK[i,j,:], Q[i,:]>  (1/sqrt(d) in Q)
            s = lax.dot_general(q_h, k_h, (((1,), (1,)), ((), ())),
                                preferred_element_type=jnp.float32)  # (tq,lk)
            s = s + jnp.sum(tmk_h * q_h[:, None, :], axis=-1)
            s = jnp.where(masked, NEG_PAD, s)   # finite pad == torch semantics

            # online softmax across kv tiles (unnormalized accumulation)
            m_prev = m_sc[h]                                          # (tq, 1)
            m_new = jnp.maximum(m_prev, jnp.max(s, axis=-1, keepdims=True))
            alpha = jnp.exp(m_prev - m_new)
            p = jnp.exp(s - m_new)                                    # (tq, lk)
            l_sc[h] = alpha * l_sc[h] + jnp.sum(p, axis=-1, keepdims=True)

            tmv_h = tmv_ref[0, :, :, lo:lo + d].astype(jnp.float32)   # (tq,lk,d)
            pv = jnp.dot(p, v_h, preferred_element_type=jnp.float32)  # (tq, d)
            pv = pv + jnp.sum(p[:, :, None] * tmv_h, axis=1)          # time-V
            acc_sc[h] = alpha * acc_sc[h] + pv
            m_sc[h] = m_new

        @pl.when(ki == pl.num_programs(2) - 1)
        def _():
            # deferred normalization of the (tq, d) accumulators; EUP rcp.
            inv = pl.reciprocal(l_sc[...], approx=True)               # (hn,tq,1)
            o_ref[0] = jnp.concatenate(
                [(acc_sc[h] * inv[h]).astype(o_ref.dtype)
                 for h in range(head_num)],
                axis=-1)                                              # (tq, H)

    if causal:
        def kernel(q_ref, k_ref, v_ref, tmk_ref, tmv_ref, tmask_ref,
                   o_ref, m_sc, l_sc, acc_sc):
            _body(q_ref, k_ref, v_ref, tmk_ref, tmv_ref, tmask_ref, None,
                  o_ref, m_sc, l_sc, acc_sc)
        return kernel
    return _body


# --------------------------------------------------------------------------
# VMEM accounting & tile selection
# --------------------------------------------------------------------------
def _vmem_bytes(tq, lk, H, head_num, d, general_mask):
    """Double-buffered input/output blocks + lane-padded scratch, in bytes."""
    pad8 = lambda n: ((n + 7) // 8) * 8
    pad128 = lambda n: ((n + 127) // 128) * 128
    tm = 2 * 2 * tq * pad8(lk) * pad128(H) * 2          # tmK + tmV, bf16
    kv = 2 * 2 * pad8(lk) * pad128(H) * 4               # K + V, f32
    qo = 2 * 2 * pad8(tq) * pad128(H) * 4               # Q + out, f32
    tmsk = 2 * pad8(tq) * 128 * 4                       # (1, tq, 1) row mask
    amsk = 2 * pad8(tq) * pad128(lk) * 4 if general_mask else 0
    scr = head_num * pad8(tq) * (2 * 128 + pad128(d)) * 4   # m, l, acc
    return tm + kv + qo + tmsk + amsk + scr


def _divisor_tiles(L, step):
    """Divisors of L that are multiples of `step`, plus L itself, descending."""
    cands = {L}
    m = step
    while m < L:
        if L % m == 0:
            cands.add(m)
        m += step
    return sorted(cands, reverse=True)


def _choose_tiles(L, H, head_num, d, general_mask, budget_bytes):
    # tq: second-minor dims only -> multiple of 8 (or full L).
    # lk: lane dim of the streamed attn-mask / score tensor -> multiple of 128
    #     (or full L), which also satisfies bf16 sublane packing of the tm tile.
    tq_c = _divisor_tiles(L, 8)
    lk_c = _divisor_tiles(L, 128)
    best = None
    for tq in tq_c:
        for lk in lk_c:
            b = _vmem_bytes(tq, lk, H, head_num, d, general_mask)
            if b <= budget_bytes:
                score = tq * lk
                if best is None or score > best[0]:
                    best = (score, tq, lk, b)
    if best is None:                       # fall back to the smallest tiles
        tq, lk = tq_c[-1], lk_c[-1]
        return tq, lk, _vmem_bytes(tq, lk, H, head_num, d, general_mask)
    return best[1], best[2], best[3]


# --------------------------------------------------------------------------
# Wrapper
# --------------------------------------------------------------------------
def time_aware_mha(queries, keys, time_mask, attn_mask,
                   time_matrix_K, time_matrix_V, abs_pos_K, abs_pos_V,
                   Wq, bq, Wk, bk, Wv, bv, head_num,
                   *, causal_attn_mask=False,
                   q_tile=None, kv_tile=None,
                   tile_vmem_budget_bytes=40 << 20,
                   vmem_limit_bytes=None,
                   time_matrix_dtype=jnp.bfloat16):
    B, L, H = queries.shape
    assert H % head_num == 0
    d = H // head_num
    scale = 1.0 / math.sqrt(d)

    # --- cheap O(B*L*H) glue: projections + algebraic fusions ---------------
    Q = (queries @ Wq.T + bq) * scale          # fold 1/sqrt(d) into Q once
    K = keys @ Wk.T + bk + abs_pos_K           # fuse K + abs_pos_K
    V = keys @ Wv.T + bv + abs_pos_V           # fuse V + abs_pos_V

    # dominant HBM streams -> bf16 storage (upcast to f32 inside the kernel)
    tmK = time_matrix_K.astype(time_matrix_dtype)
    tmV = time_matrix_V.astype(time_matrix_dtype)

    tmask = time_mask.astype(jnp.float32)[:, :, None]        # (B, L, 1)

    general_mask = not causal_attn_mask
    tq, lk, accounted = _choose_tiles(L, H, head_num, d, general_mask,
                                      tile_vmem_budget_bytes)
    if q_tile is not None:
        tq = q_tile
    if kv_tile is not None:
        lk = kv_tile
    if q_tile is not None or kv_tile is not None:
        accounted = _vmem_bytes(tq, lk, H, head_num, d, general_mask)
    assert L % tq == 0 and L % lk == 0, "tiles must divide the sequence length"
    n_q, n_kv = L // tq, L // lk

    if vmem_limit_bytes is None:
        # cap at 56 MiB (safe on v7x's 64 MiB); raise explicitly on v5e/v6e
        # (128 MiB) together with tile_vmem_budget_bytes for bigger tiles.
        vmem_limit_bytes = min(max(accounted + (8 << 20), 32 << 20), 56 << 20)
        vmem_limit_bytes = max(vmem_limit_bytes, accounted + (4 << 20))

    in_specs = [
        pl.BlockSpec((1, tq, H), lambda b, qi, ki: (b, qi, 0)),        # Q
        pl.BlockSpec((1, lk, H), lambda b, qi, ki: (b, ki, 0)),        # K+posK
        pl.BlockSpec((1, lk, H), lambda b, qi, ki: (b, ki, 0)),        # V+posV
        pl.BlockSpec((1, tq, lk, H), lambda b, qi, ki: (b, qi, ki, 0)),  # tmK
        pl.BlockSpec((1, tq, lk, H), lambda b, qi, ki: (b, qi, ki, 0)),  # tmV
        pl.BlockSpec((1, tq, 1), lambda b, qi, ki: (b, qi, 0)),          # rowmask
    ]
    inputs = [Q, K, V, tmK, tmV, tmask]
    if general_mask:
        in_specs.append(pl.BlockSpec((tq, lk), lambda b, qi, ki: (qi, ki)))
        inputs.append(attn_mask.astype(jnp.float32))                    # (L, L)

    kernel = _make_kernel(head_num, d, tq, lk, causal_attn_mask)

    out = pl.pallas_call(
        kernel,
        out_shape=jax.ShapeDtypeStruct((B, L, H), jnp.float32),
        grid_spec=pltpu.PrefetchScalarGridSpec(
            num_scalar_prefetch=0,
            grid=(B, n_q, n_kv),                          # reduction axis last
            in_specs=in_specs,
            out_specs=pl.BlockSpec((1, tq, H), lambda b, qi, ki: (b, qi, 0)),
            scratch_shapes=[
                pltpu.VMEM((head_num, tq, 1), jnp.float32),   # running max
                pltpu.VMEM((head_num, tq, 1), jnp.float32),   # running denom
                pltpu.VMEM((head_num, tq, d), jnp.float32),   # running numerator
            ],
        ),
        compiler_params=pltpu.CompilerParams(
            dimension_semantics=("parallel", "parallel", "arbitrary"),
            vmem_limit_bytes=int(vmem_limit_bytes),
        ),
    )(*inputs)

    # kernel writes head h into columns [h*d, (h+1)*d) -> already matches the
    # torch cat(split(...)) merged-head layout.
    return out


# --------------------------------------------------------------------------
# Pure-JAX reference (mirrors the torch forward, eval mode)
# --------------------------------------------------------------------------
def ref_forward(queries, keys, time_mask, attn_mask,
                time_matrix_K, time_matrix_V, abs_pos_K, abs_pos_V,
                Wq, bq, Wk, bk, Wv, bv, head_num):
    B, L, H = queries.shape
    d = H // head_num
    Q = queries @ Wq.T + bq
    K = keys @ Wk.T + bk
    V = keys @ Wv.T + bv

    def sc(x):
        return jnp.concatenate(jnp.split(x, head_num, axis=2), axis=0)

    def sc4(x):
        return jnp.concatenate(jnp.split(x, head_num, axis=3), axis=0)

    Q_, K_, V_ = sc(Q), sc(K), sc(V)
    pK_, pV_ = sc(abs_pos_K), sc(abs_pos_V)
    tmK_, tmV_ = sc4(time_matrix_K), sc4(time_matrix_V)

    w = jnp.einsum('bid,bjd->bij', Q_, K_)
    w += jnp.einsum('bid,bjd->bij', Q_, pK_)
    w += jnp.einsum('bijd,bid->bij', tmK_, Q_)
    w = w / (d ** 0.5)

    tm = jnp.tile(time_mask, (head_num, 1))[:, :, None]
    am = attn_mask[None, :, :]
    pad = jnp.float32(NEG_PAD)
    w = jnp.where(tm, pad, w)
    w = jnp.where(am, pad, w)
    w = jax.nn.softmax(w, axis=-1)

    out = jnp.einsum('bij,bjd->bid', w, V_)
    out += jnp.einsum('bij,bjd->bid', w, pV_)
    out += jnp.einsum('bij,bijd->bid', w, tmV_)
    return jnp.concatenate(jnp.split(out, head_num, axis=0), axis=2)


if __name__ == "__main__":
    B, L, H, head_num = 2, 8, 32, 4  # head_size = 8
    key = jax.random.PRNGKey(0)
    ks = jax.random.split(key, 12)

    queries = jax.random.normal(ks[0], (B, L, H), jnp.float32)
    keys_in = jax.random.normal(ks[1], (B, L, H), jnp.float32)
    time_matrix_K = jax.random.normal(ks[2], (B, L, L, H), jnp.float32)
    time_matrix_V = jax.random.normal(ks[3], (B, L, L, H), jnp.float32)
    abs_pos_K = jax.random.normal(ks[4], (B, L, H), jnp.float32)
    abs_pos_V = jax.random.normal(ks[5], (B, L, H), jnp.float32)

    # masks: True means "mask out" (replaced by -2**32+1), like the torch code.
    time_mask = jax.random.bernoulli(ks[6], 0.2, (B, L))
    attn_mask = jnp.triu(jnp.ones((L, L), dtype=bool), k=1)  # causal

    # deterministic "Linear" parameters (synthetic, not a checkpoint load)
    Wq = 0.1 * jax.random.normal(ks[7], (H, H), jnp.float32)
    Wk = 0.1 * jax.random.normal(ks[8], (H, H), jnp.float32)
    Wv = 0.1 * jax.random.normal(ks[9], (H, H), jnp.float32)
    bq = 0.1 * jax.random.normal(ks[10], (H,), jnp.float32)
    bk = 0.1 * jax.random.normal(ks[11], (H,), jnp.float32)
    bv = jnp.zeros((H,), jnp.float32)

    args = (queries, keys_in, time_mask, attn_mask,
            time_matrix_K, time_matrix_V, abs_pos_K, abs_pos_V,
            Wq, bq, Wk, bk, Wv, bv, head_num)

    # general path (arbitrary attn_mask streamed as a small f32 block)
    out_general = time_aware_mha(*args, causal_attn_mask=False)
    # causal fast path (attn mask rebuilt in-kernel from iota; no mask stream)
    out_causal = time_aware_mha(*args, causal_attn_mask=True)
    out_general, out_causal = jax.block_until_ready((out_general, out_causal))

    # reference consistent with the intentional bf16 quantization of the time
    # matrices (isolates kernel correctness from the storage-format choice)
    tmK_q = time_matrix_K.astype(jnp.bfloat16).astype(jnp.float32)
    tmV_q = time_matrix_V.astype(jnp.bfloat16).astype(jnp.float32)
    ref_q = ref_forward(queries, keys_in, time_mask, attn_mask,
                        tmK_q, tmV_q, abs_pos_K, abs_pos_V,
                        Wq, bq, Wk, bk, Wv, bv, head_num)
    np.testing.assert_allclose(np.asarray(out_general), np.asarray(ref_q),
                               rtol=5e-3, atol=5e-3)
    np.testing.assert_allclose(np.asarray(out_causal), np.asarray(ref_q),
                               rtol=5e-3, atol=5e-3)

    # loose sanity check against the full-f32 reference (bf16 tm streams are
    # the only intentional deviation)
    ref_f32 = ref_forward(*args)
    np.testing.assert_allclose(np.asarray(out_general), np.asarray(ref_f32),
                               rtol=1e-1, atol=1e-1)

    print("KERNEL_OK")
</pallas_src>

<mosaic_0001>
module attributes {stable_mosaic.version = 11 : i64} {
  func.func @_body(%arg0: i32, %arg1: i32, %arg2: i32, %arg3: memref<1x8x32xf32, #tpu.memory_space<vmem>>, %arg4: memref<1x8x32xf32, #tpu.memory_space<vmem>>, %arg5: memref<1x8x32xf32, #tpu.memory_space<vmem>>, %arg6: memref<1x8x8x32xbf16, #tpu.memory_space<vmem>>, %arg7: memref<1x8x8x32xbf16, #tpu.memory_space<vmem>>, %arg8: memref<1x8x1xf32, #tpu.memory_space<vmem>>, %arg9: memref<8x8xf32, #tpu.memory_space<vmem>>, %arg10: memref<1x8x32xf32, #tpu.memory_space<vmem>>, %arg11: memref<4x8x1xf32, #tpu.memory_space<vmem>>, %arg12: memref<4x8x1xf32, #tpu.memory_space<vmem>>, %arg13: memref<4x8x8xf32, #tpu.memory_space<vmem>>) attributes {dimension_semantics = [#tpu.dimension_semantics<parallel>, #tpu.dimension_semantics<parallel>, #tpu.dimension_semantics<arbitrary>], iteration_bounds = array<i64: 2, 1, 1>, scalar_prefetch = 0 : i64, scratch_operands = 3 : i64, tpu.core_type = #tpu.core_type<tc>, window_params = [{transform_indices = @transform_0, window_bounds = array<i64: 1, 8, 32>}, {transform_indices = @transform_1, window_bounds = array<i64: 1, 8, 32>}, {transform_indices = @transform_2, window_bounds = array<i64: 1, 8, 32>}, {transform_indices = @transform_3, window_bounds = array<i64: 1, 8, 8, 32>}, {transform_indices = @transform_4, window_bounds = array<i64: 1, 8, 8, 32>}, {transform_indices = @transform_5, window_bounds = array<i64: 1, 8, 1>}, {transform_indices = @transform_6, window_bounds = array<i64: 8, 8>}, {transform_indices = @transform_7, window_bounds = array<i64: 1, 8, 32>}]} {
    %c0_i32 = arith.constant 0 : i32
    %0 = arith.cmpi eq, %arg2, %c0_i32 : i32
    %1 = arith.extui %0 : i1 to i32
    %c0_i32_0 = arith.constant 0 : i32
    %2 = arith.cmpi ne, %1, %c0_i32_0 : i32
    scf.if %2 {
      %cst_170 = arith.constant 0xFF800000 : f32
      %239 = vector.broadcast %cst_170 : f32 to vector<4x8x1xf32>
      %c0_171 = arith.constant 0 : index
      %c0_172 = arith.constant 0 : index
      %c0_173 = arith.constant 0 : index
      %240 = vector.load %arg11[%c0_171, %c0_172, %c0_173] : memref<4x8x1xf32, #tpu.memory_space<vmem>>, vector<4x8x1xf32>
      tpu.vector_store %arg11[%c0_171, %c0_172, %c0_173], %239 {strides = array<i32>} : memref<4x8x1xf32, #tpu.memory_space<vmem>>, vector<4x8x1xf32>,
      %cst_174 = arith.constant 0.000000e+00 : f32
      %241 = vector.broadcast %cst_174 : f32 to vector<4x8x1xf32>
      %c0_175 = arith.constant 0 : index
      %c0_176 = arith.constant 0 : index
      %c0_177 = arith.constant 0 : index
      %242 = vector.load %arg12[%c0_175, %c0_176, %c0_177] : memref<4x8x1xf32, #tpu.memory_space<vmem>>, vector<4x8x1xf32>
      tpu.vector_store %arg12[%c0_175, %c0_176, %c0_177], %241 {strides = array<i32>} : memref<4x8x1xf32, #tpu.memory_space<vmem>>, vector<4x8x1xf32>,
      %cst_178 = arith.constant 0.000000e+00 : f32
      %243 = vector.broadcast %cst_178 : f32 to vector<4x8x8xf32>
      %c0_179 = arith.constant 0 : index
      %c0_180 = arith.constant 0 : index
      %c0_181 = arith.constant 0 : index
      %244 = vector.load %arg13[%c0_179, %c0_180, %c0_181] : memref<4x8x8xf32, #tpu.memory_space<vmem>>, vector<4x8x8xf32>
      tpu.vector_store %arg13[%c0_179, %c0_180, %c0_181], %243 {strides = array<i32>} : memref<4x8x8xf32, #tpu.memory_space<vmem>>, vector<4x8x8xf32>,
    } else {
    }
    %c0 = arith.constant 0 : index
    %c0_1 = arith.constant 0 : index
    %c0_2 = arith.constant 0 : index
    %3 = vector.load %arg8[%c0, %c0_1, %c0_2] : memref<1x8x1xf32, #tpu.memory_space<vmem>>, vector<1x8x1xf32>
    %4 = vector.shape_cast %3 : vector<1x8x1xf32> to vector<8x1xf32>
    %cst = arith.constant 0.000000e+00 : f32
    %5 = vector.broadcast %cst : f32 to vector<8x1xf32>
    %6 = arith.cmpf ogt, %4, %5 : vector<8x1xf32>
    %c0_3 = arith.constant 0 : index
    %c0_4 = arith.constant 0 : index
    %7 = vector.load %arg9[%c0_3, %c0_4] : memref<8x8xf32, #tpu.memory_space<vmem>>, vector<8x8xf32>
    %cst_5 = arith.constant 0.000000e+00 : f32
    %8 = vector.broadcast %cst_5 : f32 to vector<8x8xf32>
    %9 = arith.cmpf ogt, %7, %8 : vector<8x8xf32>
    %10 = vector.broadcast %6 : vector<8x1xi1> to vector<8x8xi1>
    %11 = arith.ori %10, %9 : vector<8x8xi1>
    %c0_6 = arith.constant 0 : index
    %c0_7 = arith.constant 0 : index
    %c0_8 = arith.constant 0 : index
    %12 = vector.load %arg3[%c0_6, %c0_7, %c0_8] : memref<1x8x32xf32, #tpu.memory_space<vmem>>, vector<1x8x8xf32>
    %13 = vector.shape_cast %12 : vector<1x8x8xf32> to vector<8x8xf32>
    %c0_9 = arith.constant 0 : index
    %c0_10 = arith.constant 0 : index
    %c0_11 = arith.constant 0 : index
    %14 = vector.load %arg4[%c0_9, %c0_10, %c0_11] : memref<1x8x32xf32, #tpu.memory_space<vmem>>, vector<1x8x8xf32>
    %15 = vector.shape_cast %14 : vector<1x8x8xf32> to vector<8x8xf32>
    %c0_12 = arith.constant 0 : index
    %c0_13 = arith.constant 0 : index
    %c0_14 = arith.constant 0 : index
    %16 = vector.load %arg5[%c0_12, %c0_13, %c0_14] : memref<1x8x32xf32, #tpu.memory_space<vmem>>, vector<1x8x8xf32>
    %17 = vector.shape_cast %16 : vector<1x8x8xf32> to vector<8x8xf32>
    %c0_15 = arith.constant 0 : index
    %c0_16 = arith.constant 0 : index
    %c0_17 = arith.constant 0 : index
    %c0_18 = arith.constant 0 : index
    %18 = vector.load %arg6[%c0_15, %c0_16, %c0_17, %c0_18] : memref<1x8x8x32xbf16, #tpu.memory_space<vmem>>, vector<1x8x8x8xbf16>
    %19 = vector.shape_cast %18 : vector<1x8x8x8xbf16> to vector<8x8x8xbf16>
    %20 = arith.extf %19 : vector<8x8x8xbf16> to vector<8x8x8xf32>
    %cst_19 = arith.constant dense<0.000000e+00> : vector<8x8xf32>
    %21 = tpu.matmul %13, %15, %cst_19 {dimension_numbers = #tpu.dot_dimension_numbers<[1], [1], [0], [0], [0, 0, 1, 0], [], []>} : vector<8x8xf32>, vector<8x8xf32>, vector<8x8xf32> -> vector<8x8xf32>
    %22 = vector.shape_cast %13 : vector<8x8xf32> to vector<8x1x8xf32>
    %23 = vector.broadcast %22 : vector<8x1x8xf32> to vector<8x8x8xf32>
    %24 = arith.mulf %20, %23 : vector<8x8x8xf32>
    %cst_20 = arith.constant dense<0.000000e+00> : vector<8x8xf32>
    %25 = vector.multi_reduction <add>, %24, %cst_20 [2] : vector<8x8x8xf32> to vector<8x8xf32>
    %26 = arith.addf %21, %25 : vector<8x8xf32>
    %cst_21 = arith.constant -4.2949673E+9 : f32
    %27 = vector.broadcast %cst_21 : f32 to vector<8x8xf32>
    %28 = arith.select %11, %27, %26 : vector<8x8xi1>, vector<8x8xf32>
    %c0_22 = arith.constant 0 : index
    %c0_23 = arith.constant 0 : index
    %c0_24 = arith.constant 0 : index
    %29 = vector.load %arg11[%c0_22, %c0_23, %c0_24] : memref<4x8x1xf32, #tpu.memory_space<vmem>>, vector<1x8x1xf32>
    %30 = vector.shape_cast %29 : vector<1x8x1xf32> to vector<8x1xf32>
    %cst_25 = arith.constant dense<0xFF800000> : vector<8xf32>
    %31 = vector.multi_reduction <maximumf>, %28, %cst_25 [1] : vector<8x8xf32> to vector<8xf32>
    %32 = vector.shape_cast %31 : vector<8xf32> to vector<8x1xf32>
    %33 = arith.maximumf %30, %32 : vector<8x1xf32>
    %34 = arith.subf %30, %33 : vector<8x1xf32>
    %35 = math.exp %34 : vector<8x1xf32>
    %36 = vector.broadcast %33 : vector<8x1xf32> to vector<8x8xf32>
    %37 = arith.subf %28, %36 : vector<8x8xf32>
    %38 = math.exp %37 : vector<8x8xf32>
    %c0_26 = arith.constant 0 : index
    %c0_27 = arith.constant 0 : index
    %c0_28 = arith.constant 0 : index
    %39 = vector.load %arg12[%c0_26, %c0_27, %c0_28] : memref<4x8x1xf32, #tpu.memory_space<vmem>>, vector<1x8x1xf32>
    %40 = vector.shape_cast %39 : vector<1x8x1xf32> to vector<8x1xf32>
    %41 = arith.mulf %35, %40 : vector<8x1xf32>
    %cst_29 = arith.constant dense<0.000000e+00> : vector<8xf32>
    %42 = vector.multi_reduction <add>, %38, %cst_29 [1] : vector<8x8xf32> to vector<8xf32>
    %43 = vector.shape_cast %42 : vector<8xf32> to vector<8x1xf32>
    %44 = arith.addf %41, %43 : vector<8x1xf32>
    %c0_30 = arith.constant 0 : index
    %c0_31 = arith.constant 0 : index
    %c0_32 = arith.constant 0 : index
    %45 = vector.load %arg12[%c0_30, %c0_31, %c0_32] : memref<4x8x1xf32, #tpu.memory_space<vmem>>, vector<1x8x1xf32>
    %46 = vector.shape_cast %45 : vector<1x8x1xf32> to vector<8x1xf32>
    %47 = vector.shape_cast %44 : vector<8x1xf32> to vector<1x8x1xf32>
    tpu.vector_store %arg12[%c0_30, %c0_31, %c0_32], %47 {strides = array<i32>} : memref<4x8x1xf32, #tpu.memory_space<vmem>>, vector<1x8x1xf32>,
    %c0_33 = arith.constant 0 : index
    %c0_34 = arith.constant 0 : index
    %c0_35 = arith.constant 0 : index
    %c0_36 = arith.constant 0 : index
    %48 = vector.load %arg7[%c0_33, %c0_34, %c0_35, %c0_36] : memref<1x8x8x32xbf16, #tpu.memory_space<vmem>>, vector<1x8x8x8xbf16>
    %49 = vector.shape_cast %48 : vector<1x8x8x8xbf16> to vector<8x8x8xbf16>
    %50 = arith.extf %49 : vector<8x8x8xbf16> to vector<8x8x8xf32>
    %cst_37 = arith.constant dense<0.000000e+00> : vector<8x8xf32>
    %51 = tpu.matmul %38, %17, %cst_37 {dimension_numbers = #tpu.dot_dimension_numbers<[1], [0], [0], [1], [0, 0, 1, 1], [], []>} : vector<8x8xf32>, vector<8x8xf32>, vector<8x8xf32> -> vector<8x8xf32>
    %52 = vector.shape_cast %38 : vector<8x8xf32> to vector<8x8x1xf32>
    %53 = vector.broadcast %52 : vector<8x8x1xf32> to vector<8x8x8xf32>
    %54 = arith.mulf %53, %50 : vector<8x8x8xf32>
    %cst_38 = arith.constant dense<0.000000e+00> : vector<8x8xf32>
    %55 = vector.multi_reduction <add>, %54, %cst_38 [1] : vector<8x8x8xf32> to vector<8x8xf32>
    %56 = arith.addf %51, %55 : vector<8x8xf32>
    %c0_39 = arith.constant 0 : index
    %c0_40 = arith.constant 0 : index
    %c0_41 = arith.constant 0 : index
    %57 = vector.load %arg13[%c0_39, %c0_40, %c0_41] : memref<4x8x8xf32, #tpu.memory_space<vmem>>, vector<1x8x8xf32>
    %58 = vector.shape_cast %57 : vector<1x8x8xf32> to vector<8x8xf32>
    %59 = vector.broadcast %35 : vector<8x1xf32> to vector<8x8xf32>
    %60 = arith.mulf %59, %58 : vector<8x8xf32>
    %61 = arith.addf %60, %56 : vector<8x8xf32>
    %c0_42 = arith.constant 0 : index
    %c0_43 = arith.constant 0 : index
    %c0_44 = arith.constant 0 : index
    %62 = vector.load %arg13[%c0_42, %c0_43, %c0_44] : memref<4x8x8xf32, #tpu.memory_space<vmem>>, vector<1x8x8xf32>
    %63 = vector.shape_cast %62 : vector<1x8x8xf32> to vector<8x8xf32>
    %64 = vector.shape_cast %61 : vector<8x8xf32> to vector<1x8x8xf32>
    tpu.vector_store %arg13[%c0_42, %c0_43, %c0_44], %64 {strides = array<i32>} : memref<4x8x8xf32, #tpu.memory_space<vmem>>, vector<1x8x8xf32>,
    %c0_45 = arith.constant 0 : index
    %c0_46 = arith.constant 0 : index
    %c0_47 = arith.constant 0 : index
    %65 = vector.load %arg11[%c0_45, %c0_46, %c0_47] : memref<4x8x1xf32, #tpu.memory_space<vmem>>, vector<1x8x1xf32>
    %66 = vector.shape_cast %65 : vector<1x8x1xf32> to vector<8x1xf32>
    %67 = vector.shape_cast %33 : vector<8x1xf32> to vector<1x8x1xf32>
    tpu.vector_store %arg11[%c0_45, %c0_46, %c0_47], %67 {strides = array<i32>} : memref<4x8x1xf32, #tpu.memory_space<vmem>>, vector<1x8x1xf32>,
    %c0_48 = arith.constant 0 : index
    %c0_49 = arith.constant 0 : index
    %c8 = arith.constant 8 : index
    %68 = vector.load %arg3[%c0_48, %c0_49, %c8] : memref<1x8x32xf32, #tpu.memory_space<vmem>>, vector<1x8x8xf32>
    %69 = vector.shape_cast %68 : vector<1x8x8xf32> to vector<8x8xf32>
    %c0_50 = arith.constant 0 : index
    %c0_51 = arith.constant 0 : index
    %c8_52 = arith.constant 8 : index
    %70 = vector.load %arg4[%c0_50, %c0_51, %c8_52] : memref<1x8x32xf32, #tpu.memory_space<vmem>>, vector<1x8x8xf32>
    %71 = vector.shape_cast %70 : vector<1x8x8xf32> to vector<8x8xf32>
    %c0_53 = arith.constant 0 : index
    %c0_54 = arith.constant 0 : index
    %c8_55 = arith.constant 8 : index
    %72 = vector.load %arg5[%c0_53, %c0_54, %c8_55] : memref<1x8x32xf32, #tpu.memory_space<vmem>>, vector<1x8x8xf32>
    %73 = vector.shape_cast %72 : vector<1x8x8xf32> to vector<8x8xf32>
    %c0_56 = arith.constant 0 : index
    %c0_57 = arith.constant 0 : index
    %c0_58 = arith.constant 0 : index
    %c8_59 = arith.constant 8 : index
    %74 = vector.load %arg6[%c0_56, %c0_57, %c0_58, %c8_59] : memref<1x8x8x32xbf16, #tpu.memory_space<vmem>>, vector<1x8x8x8xbf16>
    %75 = vector.shape_cast %74 : vector<1x8x8x8xbf16> to vector<8x8x8xbf16>
    %76 = arith.extf %75 : vector<8x8x8xbf16> to vector<8x8x8xf32>
    %cst_60 = arith.constant dense<0.000000e+00> : vector<8x8xf32>
    %77 = tpu.matmul %69, %71, %cst_60 {dimension_numbers = #tpu.dot_dimension_numbers<[1], [1], [0], [0], [0, 0, 1, 0], [], []>} : vector<8x8xf32>, vector<8x8xf32>, vector<8x8xf32> -> vector<8x8xf32>
    %78 = vector.shape_cast %69 : vector<8x8xf32> to vector<8x1x8xf32>
    %79 = vector.broadcast %78 : vector<8x1x8xf32> to vector<8x8x8xf32>
    %80 = arith.mulf %76, %79 : vector<8x8x8xf32>
    %cst_61 = arith.constant dense<0.000000e+00> : vector<8x8xf32>
    %81 = vector.multi_reduction <add>, %80, %cst_61 [2] : vector<8x8x8xf32> to vector<8x8xf32>
    %82 = arith.addf %77, %81 : vector<8x8xf32>
    %cst_62 = arith.constant -4.2949673E+9 : f32
    %83 = vector.broadcast %cst_62 : f32 to vector<8x8xf32>
    %84 = arith.select %11, %83, %82 : vector<8x8xi1>, vector<8x8xf32>
    %c1 = arith.constant 1 : index
    %c0_63 = arith.constant 0 : index
    %c0_64 = arith.constant 0 : index
    %85 = vector.load %arg11[%c1, %c0_63, %c0_64] : memref<4x8x1xf32, #tpu.memory_space<vmem>>, vector<1x8x1xf32>
    %86 = vector.shape_cast %85 : vector<1x8x1xf32> to vector<8x1xf32>
    %cst_65 = arith.constant dense<0xFF800000> : vector<8xf32>
    %87 = vector.multi_reduction <maximumf>, %84, %cst_65 [1] : vector<8x8xf32> to vector<8xf32>
    %88 = vector.shape_cast %87 : vector<8xf32> to vector<8x1xf32>
    %89 = arith.maximumf %86, %88 : vector<8x1xf32>
    %90 = arith.subf %86, %89 : vector<8x1xf32>
    %91 = math.exp %90 : vector<8x1xf32>
    %92 = vector.broadcast %89 : vector<8x1xf32> to vector<8x8xf32>
    %93 = arith.subf %84, %92 : vector<8x8xf32>
    %94 = math.exp %93 : vector<8x8xf32>
    %c1_66 = arith.constant 1 : index
    %c0_67 = arith.constant 0 : index
    %c0_68 = arith.constant 0 : index
    %95 = vector.load %arg12[%c1_66, %c0_67, %c0_68] : memref<4x8x1xf32, #tpu.memory_space<vmem>>, vector<1x8x1xf32>
    %96 = vector.shape_cast %95 : vector<1x8x1xf32> to vector<8x1xf32>
    %97 = arith.mulf %91, %96 : vector<8x1xf32>
    %cst_69 = arith.constant dense<0.000000e+00> : vector<8xf32>
    %98 = vector.multi_reduction <add>, %94, %cst_69 [1] : vector<8x8xf32> to vector<8xf32>
    %99 = vector.shape_cast %98 : vector<8xf32> to vector<8x1xf32>
    %100 = arith.addf %97, %99 : vector<8x1xf32>
    %c1_70 = arith.constant 1 : index
    %c0_71 = arith.constant 0 : index
    %c0_72 = arith.constant 0 : index
    %101 = vector.load %arg12[%c1_70, %c0_71, %c0_72] : memref<4x8x1xf32, #tpu.memory_space<vmem>>, vector<1x8x1xf32>
    %102 = vector.shape_cast %101 : vector<1x8x1xf32> to vector<8x1xf32>
    %103 = vector.shape_cast %100 : vector<8x1xf32> to vector<1x8x1xf32>
    tpu.vector_store %arg12[%c1_70, %c0_71, %c0_72], %103 {strides = array<i32>} : memref<4x8x1xf32, #tpu.memory_space<vmem>>, vector<1x8x1xf32>,
    %c0_73 = arith.constant 0 : index
    %c0_74 = arith.constant 0 : index
    %c0_75 = arith.constant 0 : index
    %c8_76 = arith.constant 8 : index
    %104 = vector.load %arg7[%c0_73, %c0_74, %c0_75, %c8_76] : memref<1x8x8x32xbf16, #tpu.memory_space<vmem>>, vector<1x8x8x8xbf16>
    %105 = vector.shape_cast %104 : vector<1x8x8x8xbf16> to vector<8x8x8xbf16>
    %106 = arith.extf %105 : vector<8x8x8xbf16> to vector<8x8x8xf32>
    %cst_77 = arith.constant dense<0.000000e+00> : vector<8x8xf32>
    %107 = tpu.matmul %94, %73, %cst_77 {dimension_numbers = #tpu.dot_dimension_numbers<[1], [0], [0], [1], [0, 0, 1, 1], [], []>} : vector<8x8xf32>, vector<8x8xf32>, vector<8x8xf32> -> vector<8x8xf32>
    %108 = vector.shape_cast %94 : vector<8x8xf32> to vector<8x8x1xf32>
    %109 = vector.broadcast %108 : vector<8x8x1xf32> to vector<8x8x8xf32>
    %110 = arith.mulf %109, %106 : vector<8x8x8xf32>
    %cst_78 = arith.constant dense<0.000000e+00> : vector<8x8xf32>
    %111 = vector.multi_reduction <add>, %110, %cst_78 [1] : vector<8x8x8xf32> to vector<8x8xf32>
    %112 = arith.addf %107, %111 : vector<8x8xf32>
    %c1_79 = arith.constant 1 : index
    %c0_80 = arith.constant 0 : index
    %c0_81 = arith.constant 0 : index
    %113 = vector.load %arg13[%c1_79, %c0_80, %c0_81] : memref<4x8x8xf32, #tpu.memory_space<vmem>>, vector<1x8x8xf32>
    %114 = vector.shape_cast %113 : vector<1x8x8xf32> to vector<8x8xf32>
    %115 = vector.broadcast %91 : vector<8x1xf32> to vector<8x8xf32>
    %116 = arith.mulf %115, %114 : vector<8x8xf32>
    %117 = arith.addf %116, %112 : vector<8x8xf32>
    %c1_82 = arith.constant 1 : index
    %c0_83 = arith.constant 0 : index
    %c0_84 = arith.constant 0 : index
    %118 = vector.load %arg13[%c1_82, %c0_83, %c0_84] : memref<4x8x8xf32, #tpu.memory_space<vmem>>, vector<1x8x8xf32>
    %119 = vector.shape_cast %118 : vector<1x8x8xf32> to vector<8x8xf32>
    %120 = vector.shape_cast %117 : vector<8x8xf32> to vector<1x8x8xf32>
    tpu.vector_store %arg13[%c1_82, %c0_83, %c0_84], %120 {strides = array<i32>} : memref<4x8x8xf32, #tpu.memory_space<vmem>>, vector<1x8x8xf32>,
    %c1_85 = arith.constant 1 : index
    %c0_86 = arith.constant 0 : index
    %c0_87 = arith.constant 0 : index
    %121 = vector.load %arg11[%c1_85, %c0_86, %c0_87] : memref<4x8x1xf32, #tpu.memory_space<vmem>>, vector<1x8x1xf32>
    %122 = vector.shape_cast %121 : vector<1x8x1xf32> to vector<8x1xf32>
    %123 = vector.shape_cast %89 : vector<8x1xf32> to vector<1x8x1xf32>
    tpu.vector_store %arg11[%c1_85, %c0_86, %c0_87], %123 {strides = array<i32>} : memref<4x8x1xf32, #tpu.memory_space<vmem>>, vector<1x8x1xf32>,
    %c0_88 = arith.constant 0 : index
    %c0_89 = arith.constant 0 : index
    %c16 = arith.constant 16 : index
    %124 = vector.load %arg3[%c0_88, %c0_89, %c16] : memref<1x8x32xf32, #tpu.memory_space<vmem>>, vector<1x8x8xf32>
    %125 = vector.shape_cast %124 : vector<1x8x8xf32> to vector<8x8xf32>
    %c0_90 = arith.constant 0 : index
    %c0_91 = arith.constant 0 : index
    %c16_92 = arith.constant 16 : index
    %126 = vector.load %arg4[%c0_90, %c0_91, %c16_92] : memref<1x8x32xf32, #tpu.memory_space<vmem>>, vector<1x8x8xf32>
    %127 = vector.shape_cast %126 : vector<1x8x8xf32> to vector<8x8xf32>
    %c0_93 = arith.constant 0 : index
    %c0_94 = arith.constant 0 : index
    %c16_95 = arith.constant 16 : index
    %128 = vector.load %arg5[%c0_93, %c0_94, %c16_95] : memref<1x8x32xf32, #tpu.memory_space<vmem>>, vector<1x8x8xf32>
    %129 = vector.shape_cast %128 : vector<1x8x8xf32> to vector<8x8xf32>
    %c0_96 = arith.constant 0 : index
    %c0_97 = arith.constant 0 : index
    %c0_98 = arith.constant 0 : index
    %c16_99 = arith.constant 16 : index
    %130 = vector.load %arg6[%c0_96, %c0_97, %c0_98, %c16_99] : memref<1x8x8x32xbf16, #tpu.memory_space<vmem>>, vector<1x8x8x8xbf16>
    %131 = vector.shape_cast %130 : vector<1x8x8x8xbf16> to vector<8x8x8xbf16>
    %132 = arith.extf %131 : vector<8x8x8xbf16> to vector<8x8x8xf32>
    %cst_100 = arith.constant dense<0.000000e+00> : vector<8x8xf32>
    %133 = tpu.matmul %125, %127, %cst_100 {dimension_numbers = #tpu.dot_dimension_numbers<[1], [1], [0], [0], [0, 0, 1, 0], [], []>} : vector<8x8xf32>, vector<8x8xf32>, vector<8x8xf32> -> vector<8x8xf32>
    %134 = vector.shape_cast %125 : vector<8x8xf32> to vector<8x1x8xf32>
    %135 = vector.broadcast %134 : vector<8x1x8xf32> to vector<8x8x8xf32>
    %136 = arith.mulf %132, %135 : vector<8x8x8xf32>
    %cst_101 = arith.constant dense<0.000000e+00> : vector<8x8xf32>
    %137 = vector.multi_reduction <add>, %136, %cst_101 [2] : vector<8x8x8xf32> to vector<8x8xf32>
    %138 = arith.addf %133, %137 : vector<8x8xf32>
    %cst_102 = arith.constant -4.2949673E+9 : f32
    %139 = vector.broadcast %cst_102 : f32 to vector<8x8xf32>
    %140 = arith.select %11, %139, %138 : vector<8x8xi1>, vector<8x8xf32>
    %c2 = arith.constant 2 : index
    %c0_103 = arith.constant 0 : index
    %c0_104 = arith.constant 0 : index
    %141 = vector.load %arg11[%c2, %c0_103, %c0_104] : memref<4x8x1xf32, #tpu.memory_space<vmem>>, vector<1x8x1xf32>
    %142 = vector.shape_cast %141 : vector<1x8x1xf32> to vector<8x1xf32>
    %cst_105 = arith.constant dense<0xFF800000> : vector<8xf32>
    %143 = vector.multi_reduction <maximumf>, %140, %cst_105 [1] : vector<8x8xf32> to vector<8xf32>
    %144 = vector.shape_cast %143 : vector<8xf32> to vector<8x1xf32>
    %145 = arith.maximumf %142, %144 : vector<8x1xf32>
    %146 = arith.subf %142, %145 : vector<8x1xf32>
    %147 = math.exp %146 : vector<8x1xf32>
    %148 = vector.broadcast %145 : vector<8x1xf32> to vector<8x8xf32>
    %149 = arith.subf %140, %148 : vector<8x8xf32>
    %150 = math.exp %149 : vector<8x8xf32>
    %c2_106 = arith.constant 2 : index
    %c0_107 = arith.constant 0 : index
    %c0_108 = arith.constant 0 : index
    %151 = vector.load %arg12[%c2_106, %c0_107, %c0_108] : memref<4x8x1xf32, #tpu.memory_space<vmem>>, vector<1x8x1xf32>
    %152 = vector.shape_cast %151 : vector<1x8x1xf32> to vector<8x1xf32>
    %153 = arith.mulf %147, %152 : vector<8x1xf32>
    %cst_109 = arith.constant dense<0.000000e+00> : vector<8xf32>
    %154 = vector.multi_reduction <add>, %150, %cst_109 [1] : vector<8x8xf32> to vector<8xf32>
    %155 = vector.shape_cast %154 : vector<8xf32> to vector<8x1xf32>
    %156 = arith.addf %153, %155 : vector<8x1xf32>
    %c2_110 = arith.constant 2 : index
    %c0_111 = arith.constant 0 : index
    %c0_112 = arith.constant 0 : index
    %157 = vector.load %arg12[%c2_110, %c0_111, %c0_112] : memref<4x8x1xf32, #tpu.memory_space<vmem>>, vector<1x8x1xf32>
    %158 = vector.shape_cast %157 : vector<1x8x1xf32> to vector<8x1xf32>
    %159 = vector.shape_cast %156 : vector<8x1xf32> to vector<1x8x1xf32>
    tpu.vector_store %arg12[%c2_110, %c0_111, %c0_112], %159 {strides = array<i32>} : memref<4x8x1xf32, #tpu.memory_space<vmem>>, vector<1x8x1xf32>,
    %c0_113 = arith.constant 0 : index
    %c0_114 = arith.constant 0 : index
    %c0_115 = arith.constant 0 : index
    %c16_116 = arith.constant 16 : index
    %160 = vector.load %arg7[%c0_113, %c0_114, %c0_115, %c16_116] : memref<1x8x8x32xbf16, #tpu.memory_space<vmem>>, vector<1x8x8x8xbf16>
    %161 = vector.shape_cast %160 : vector<1x8x8x8xbf16> to vector<8x8x8xbf16>
    %162 = arith.extf %161 : vector<8x8x8xbf16> to vector<8x8x8xf32>
    %cst_117 = arith.constant dense<0.000000e+00> : vector<8x8xf32>
    %163 = tpu.matmul %150, %129, %cst_117 {dimension_numbers = #tpu.dot_dimension_numbers<[1], [0], [0], [1], [0, 0, 1, 1], [], []>} : vector<8x8xf32>, vector<8x8xf32>, vector<8x8xf32> -> vector<8x8xf32>
    %164 = vector.shape_cast %150 : vector<8x8xf32> to vector<8x8x1xf32>
    %165 = vector.broadcast %164 : vector<8x8x1xf32> to vector<8x8x8xf32>
    %166 = arith.mulf %165, %162 : vector<8x8x8xf32>
    %cst_118 = arith.constant dense<0.000000e+00> : vector<8x8xf32>
    %167 = vector.multi_reduction <add>, %166, %cst_118 [1] : vector<8x8x8xf32> to vector<8x8xf32>
    %168 = arith.addf %163, %167 : vector<8x8xf32>
    %c2_119 = arith.constant 2 : index
    %c0_120 = arith.constant 0 : index
    %c0_121 = arith.constant 0 : index
    %169 = vector.load %arg13[%c2_119, %c0_120, %c0_121] : memref<4x8x8xf32, #tpu.memory_space<vmem>>, vector<1x8x8xf32>
    %170 = vector.shape_cast %169 : vector<1x8x8xf32> to vector<8x8xf32>
    %171 = vector.broadcast %147 : vector<8x1xf32> to vector<8x8xf32>
    %172 = arith.mulf %171, %170 : vector<8x8xf32>
    %173 = arith.addf %172, %168 : vector<8x8xf32>
    %c2_122 = arith.constant 2 : index
    %c0_123 = arith.constant 0 : index
    %c0_124 = arith.constant 0 : index
    %174 = vector.load %arg13[%c2_122, %c0_123, %c0_124] : memref<4x8x8xf32, #tpu.memory_space<vmem>>, vector<1x8x8xf32>
    %175 = vector.shape_cast %174 : vector<1x8x8xf32> to vector<8x8xf32>
    %176 = vector.shape_cast %173 : vector<8x8xf32> to vector<1x8x8xf32>
    tpu.vector_store %arg13[%c2_122, %c0_123, %c0_124], %176 {strides = array<i32>} : memref<4x8x8xf32, #tpu.memory_space<vmem>>, vector<1x8x8xf32>,
    %c2_125 = arith.constant 2 : index
    %c0_126 = arith.constant 0 : index
    %c0_127 = arith.constant 0 : index
    %177 = vector.load %arg11[%c2_125, %c0_126, %c0_127] : memref<4x8x1xf32, #tpu.memory_space<vmem>>, vector<1x8x1xf32>
    %178 = vector.shape_cast %177 : vector<1x8x1xf32> to vector<8x1xf32>
    %179 = vector.shape_cast %145 : vector<8x1xf32> to vector<1x8x1xf32>
    tpu.vector_store %arg11[%c2_125, %c0_126, %c0_127], %179 {strides = array<i32>} : memref<4x8x1xf32, #tpu.memory_space<vmem>>, vector<1x8x1xf32>,
    %c0_128 = arith.constant 0 : index
    %c0_129 = arith.constant 0 : index
    %c24 = arith.constant 24 : index
    %180 = vector.load %arg3[%c0_128, %c0_129, %c24] : memref<1x8x32xf32, #tpu.memory_space<vmem>>, vector<1x8x8xf32>
    %181 = vector.shape_cast %180 : vector<1x8x8xf32> to vector<8x8xf32>
    %c0_130 = arith.constant 0 : index
    %c0_131 = arith.constant 0 : index
    %c24_132 = arith.constant 24 : index
    %182 = vector.load %arg4[%c0_130, %c0_131, %c24_132] : memref<1x8x32xf32, #tpu.memory_space<vmem>>, vector<1x8x8xf32>
    %183 = vector.shape_cast %182 : vector<1x8x8xf32> to vector<8x8xf32>
    %c0_133 = arith.constant 0 : index
    %c0_134 = arith.constant 0 : index
    %c24_135 = arith.constant 24 : index
    %184 = vector.load %arg5[%c0_133, %c0_134, %c24_135] : memref<1x8x32xf32, #tpu.memory_space<vmem>>, vector<1x8x8xf32>
    %185 = vector.shape_cast %184 : vector<1x8x8xf32> to vector<8x8xf32>
    %c0_136 = arith.constant 0 : index
    %c0_137 = arith.constant 0 : index
    %c0_138 = arith.constant 0 : index
    %c24_139 = arith.constant 24 : index
    %186 = vector.load %arg6[%c0_136, %c0_137, %c0_138, %c24_139] : memref<1x8x8x32xbf16, #tpu.memory_space<vmem>>, vector<1x8x8x8xbf16>
    %187 = vector.shape_cast %186 : vector<1x8x8x8xbf16> to vector<8x8x8xbf16>
    %188 = arith.extf %187 : vector<8x8x8xbf16> to vector<8x8x8xf32>
    %cst_140 = arith.constant dense<0.000000e+00> : vector<8x8xf32>
    %189 = tpu.matmul %181, %183, %cst_140 {dimension_numbers = #tpu.dot_dimension_numbers<[1], [1], [0], [0], [0, 0, 1, 0], [], []>} : vector<8x8xf32>, vector<8x8xf32>, vector<8x8xf32> -> vector<8x8xf32>
    %190 = vector.shape_cast %181 : vector<8x8xf32> to vector<8x1x8xf32>
    %191 = vector.broadcast %190 : vector<8x1x8xf32> to vector<8x8x8xf32>
    %192 = arith.mulf %188, %191 : vector<8x8x8xf32>
    %cst_141 = arith.constant dense<0.000000e+00> : vector<8x8xf32>
    %193 = vector.multi_reduction <add>, %192, %cst_141 [2] : vector<8x8x8xf32> to vector<8x8xf32>
    %194 = arith.addf %189, %193 : vector<8x8xf32>
    %cst_142 = arith.constant -4.2949673E+9 : f32
    %195 = vector.broadcast %cst_142 : f32 to vector<8x8xf32>
    %196 = arith.select %11, %195, %194 : vector<8x8xi1>, vector<8x8xf32>
    %c3 = arith.constant 3 : index
    %c0_143 = arith.constant 0 : index
    %c0_144 = arith.constant 0 : index
    %197 = vector.load %arg11[%c3, %c0_143, %c0_144] : memref<4x8x1xf32, #tpu.memory_space<vmem>>, vector<1x8x1xf32>
    %198 = vector.shape_cast %197 : vector<1x8x1xf32> to vector<8x1xf32>
    %cst_145 = arith.constant dense<0xFF800000> : vector<8xf32>
    %199 = vector.multi_reduction <maximumf>, %196, %cst_145 [1] : vector<8x8xf32> to vector<8xf32>
    %200 = vector.shape_cast %199 : vector<8xf32> to vector<8x1xf32>
    %201 = arith.maximumf %198, %200 : vector<8x1xf32>
    %202 = arith.subf %198, %201 : vector<8x1xf32>
    %203 = math.exp %202 : vector<8x1xf32>
    %204 = vector.broadcast %201 : vector<8x1xf32> to vector<8x8xf32>
    %205 = arith.subf %196, %204 : vector<8x8xf32>
    %206 = math.exp %205 : vector<8x8xf32>
    %c3_146 = arith.constant 3 : index
    %c0_147 = arith.constant 0 : index
    %c0_148 = arith.constant 0 : index
    %207 = vector.load %arg12[%c3_146, %c0_147, %c0_148] : memref<4x8x1xf32, #tpu.memory_space<vmem>>, vector<1x8x1xf32>
    %208 = vector.shape_cast %207 : vector<1x8x1xf32> to vector<8x1xf32>
    %209 = arith.mulf %203, %208 : vector<8x1xf32>
    %cst_149 = arith.constant dense<0.000000e+00> : vector<8xf32>
    %210 = vector.multi_reduction <add>, %206, %cst_149 [1] : vector<8x8xf32> to vector<8xf32>
    %211 = vector.shape_cast %210 : vector<8xf32> to vector<8x1xf32>
    %212 = arith.addf %209, %211 : vector<8x1xf32>
    %c3_150 = arith.constant 3 : index
    %c0_151 = arith.constant 0 : index
    %c0_152 = arith.constant 0 : index
    %213 = vector.load %arg12[%c3_150, %c0_151, %c0_152] : memref<4x8x1xf32, #tpu.memory_space<vmem>>, vector<1x8x1xf32>
    %214 = vector.shape_cast %213 : vector<1x8x1xf32> to vector<8x1xf32>
    %215 = vector.shape_cast %212 : vector<8x1xf32> to vector<1x8x1xf32>
    tpu.vector_store %arg12[%c3_150, %c0_151, %c0_152], %215 {strides = array<i32>} : memref<4x8x1xf32, #tpu.memory_space<vmem>>, vector<1x8x1xf32>,
    %c0_153 = arith.constant 0 : index
    %c0_154 = arith.constant 0 : index
    %c0_155 = arith.constant 0 : index
    %c24_156 = arith.constant 24 : index
    %216 = vector.load %arg7[%c0_153, %c0_154, %c0_155, %c24_156] : memref<1x8x8x32xbf16, #tpu.memory_space<vmem>>, vector<1x8x8x8xbf16>
    %217 = vector.shape_cast %216 : vector<1x8x8x8xbf16> to vector<8x8x8xbf16>
    %218 = arith.extf %217 : vector<8x8x8xbf16> to vector<8x8x8xf32>
    %cst_157 = arith.constant dense<0.000000e+00> : vector<8x8xf32>
    %219 = tpu.matmul %206, %185, %cst_157 {dimension_numbers = #tpu.dot_dimension_numbers<[1], [0], [0], [1], [0, 0, 1, 1], [], []>} : vector<8x8xf32>, vector<8x8xf32>, vector<8x8xf32> -> vector<8x8xf32>
    %220 = vector.shape_cast %206 : vector<8x8xf32> to vector<8x8x1xf32>
    %221 = vector.broadcast %220 : vector<8x8x1xf32> to vector<8x8x8xf32>
    %222 = arith.mulf %221, %218 : vector<8x8x8xf32>
    %cst_158 = arith.constant dense<0.000000e+00> : vector<8x8xf32>
    %223 = vector.multi_reduction <add>, %222, %cst_158 [1] : vector<8x8x8xf32> to vector<8x8xf32>
    %224 = arith.addf %219, %223 : vector<8x8xf32>
    %c3_159 = arith.constant 3 : index
    %c0_160 = arith.constant 0 : index
    %c0_161 = arith.constant 0 : index
    %225 = vector.load %arg13[%c3_159, %c0_160, %c0_161] : memref<4x8x8xf32, #tpu.memory_space<vmem>>, vector<1x8x8xf32>
    %226 = vector.shape_cast %225 : vector<1x8x8xf32> to vector<8x8xf32>
    %227 = vector.broadcast %203 : vector<8x1xf32> to vector<8x8xf32>
    %228 = arith.mulf %227, %226 : vector<8x8xf32>
    %229 = arith.addf %228, %224 : vector<8x8xf32>
    %c3_162 = arith.constant 3 : index
    %c0_163 = arith.constant 0 : index
    %c0_164 = arith.constant 0 : index
    %230 = vector.load %arg13[%c3_162, %c0_163, %c0_164] : memref<4x8x8xf32, #tpu.memory_space<vmem>>, vector<1x8x8xf32>
    %231 = vector.shape_cast %230 : vector<1x8x8xf32> to vector<8x8xf32>
    %232 = vector.shape_cast %229 : vector<8x8xf32> to vector<1x8x8xf32>
    tpu.vector_store %arg13[%c3_162, %c0_163, %c0_164], %232 {strides = array<i32>} : memref<4x8x8xf32, #tpu.memory_space<vmem>>, vector<1x8x8xf32>,
    %c3_165 = arith.constant 3 : index
    %c0_166 = arith.constant 0 : index
    %c0_167 = arith.constant 0 : index
    %233 = vector.load %arg11[%c3_165, %c0_166, %c0_167] : memref<4x8x1xf32, #tpu.memory_space<vmem>>, vector<1x8x1xf32>
    %234 = vector.shape_cast %233 : vector<1x8x1xf32> to vector<8x1xf32>
    %235 = vector.shape_cast %201 : vector<8x1xf32> to vector<1x8x1xf32>
    tpu.vector_store %arg11[%c3_165, %c0_166, %c0_167], %235 {strides = array<i32>} : memref<4x8x1xf32, #tpu.memory_space<vmem>>, vector<1x8x1xf32>,
    %c0_i32_168 = arith.constant 0 : i32
    %236 = arith.cmpi eq, %arg2, %c0_i32_168 : i32
    %237 = arith.extui %236 : i1 to i32
    %c0_i32_169 = arith.constant 0 : i32
    %238 = arith.cmpi ne, %237, %c0_i32_169 : i32
    scf.if %238 {
      %c0_170 = arith.constant 0 : index
      %c0_171 = arith.constant 0 : index
      %c0_172 = arith.constant 0 : index
      %239 = vector.load %arg12[%c0_170, %c0_171, %c0_172] : memref<4x8x1xf32, #tpu.memory_space<vmem>>, vector<4x8x1xf32>
      %240 = tpu.reciprocal %239 {approx = true} : vector<4x8x1xf32> -> vector<4x8x1xf32>
      %c0_173 = arith.constant 0 : index
      %c0_174 = arith.constant 0 : index
      %c0_175 = arith.constant 0 : index
      %241 = vector.load %arg13[%c0_173, %c0_174, %c0_175] : memref<4x8x8xf32, #tpu.memory_space<vmem>>, vector<1x8x8xf32>
      %242 = vector.shape_cast %241 : vector<1x8x8xf32> to vector<8x8xf32>
      %243 = vector.extract_strided_slice %240 {offsets = [0, 0, 0], sizes = [1, 8, 1], strides = [1, 1, 1]} : vector<4x8x1xf32> to vector<1x8x1xf32>
      %244 = vector.shape_cast %243 : vector<1x8x1xf32> to vector<8x1xf32>
      %245 = vector.broadcast %244 : vector<8x1xf32> to vector<8x8xf32>
      %246 = arith.mulf %242, %245 : vector<8x8xf32>
      %c1_176 = arith.constant 1 : index
      %c0_177 = arith.constant 0 : index
      %c0_178 = arith.constant 0 : index
      %247 = vector.load %arg13[%c1_176, %c0_177, %c0_178] : memref<4x8x8xf32, #tpu.memory_space<vmem>>, vector<1x8x8xf32>
      %248 = vector.shape_cast %247 : vector<1x8x8xf32> to vector<8x8xf32>
      %249 = vector.extract_strided_slice %240 {offsets = [1, 0, 0], sizes = [1, 8, 1], strides = [1, 1, 1]} : vector<4x8x1xf32> to vector<1x8x1xf32>
      %250 = vector.shape_cast %249 : vector<1x8x1xf32> to vector<8x1xf32>
      %251 = vector.broadcast %250 : vector<8x1xf32> to vector<8x8xf32>
      %252 = arith.mulf %248, %251 : vector<8x8xf32>
      %c2_179 = arith.constant 2 : index
      %c0_180 = arith.constant 0 : index
      %c0_181 = arith.constant 0 : index
      %253 = vector.load %arg13[%c2_179, %c0_180, %c0_181] : memref<4x8x8xf32, #tpu.memory_space<vmem>>, vector<1x8x8xf32>
      %254 = vector.shape_cast %253 : vector<1x8x8xf32> to vector<8x8xf32>
      %255 = vector.extract_strided_slice %240 {offsets = [2, 0, 0], sizes = [1, 8, 1], strides = [1, 1, 1]} : vector<4x8x1xf32> to vector<1x8x1xf32>
      %256 = vector.shape_cast %255 : vector<1x8x1xf32> to vector<8x1xf32>
      %257 = vector.broadcast %256 : vector<8x1xf32> to vector<8x8xf32>
      %258 = arith.mulf %254, %257 : vector<8x8xf32>
      %c3_182 = arith.constant 3 : index
      %c0_183 = arith.constant 0 : index
      %c0_184 = arith.constant 0 : index
      %259 = vector.load %arg13[%c3_182, %c0_183, %c0_184] : memref<4x8x8xf32, #tpu.memory_space<vmem>>, vector<1x8x8xf32>
      %260 = vector.shape_cast %259 : vector<1x8x8xf32> to vector<8x8xf32>
      %261 = vector.extract_strided_slice %240 {offsets = [3, 0, 0], sizes = [1, 8, 1], strides = [1, 1, 1]} : vector<4x8x1xf32> to vector<1x8x1xf32>
      %262 = vector.shape_cast %261 : vector<1x8x1xf32> to vector<8x1xf32>
      %263 = vector.broadcast %262 : vector<8x1xf32> to vector<8x8xf32>
      %264 = arith.mulf %260, %263 : vector<8x8xf32>
      %265 = tpu.concatenate %246, %252, %258, %264 in 1 : vector<8x8xf32>, vector<8x8xf32>, vector<8x8xf32>, vector<8x8xf32> -> vector<8x32xf32>
      %c0_185 = arith.constant 0 : index
      %c0_186 = arith.constant 0 : index
      %c0_187 = arith.constant 0 : index
      %266 = vector.load %arg10[%c0_185, %c0_186, %c0_187] : memref<1x8x32xf32, #tpu.memory_space<vmem>>, vector<1x8x32xf32>
      %267 = vector.shape_cast %266 : vector<1x8x32xf32> to vector<8x32xf32>
      %268 = vector.shape_cast %265 : vector<8x32xf32> to vector<1x8x32xf32>
      tpu.vector_store %arg10[%c0_185, %c0_186, %c0_187], %268 {strides = array<i32>} : memref<1x8x32xf32, #tpu.memory_space<vmem>>, vector<1x8x32xf32>,
    } else {
    }
    return
  }
  func.func @transform_0(%arg0: i32, %arg1: i32, %arg2: i32) -> (i32, i32, i32) {
    %c0_i32 = arith.constant 0 : i32
    %c0_i32_0 = arith.constant 0 : i32
    return %arg0, %arg1, %c0_i32 : i32, i32, i32
  }
  func.func @transform_1(%arg0: i32, %arg1: i32, %arg2: i32) -> (i32, i32, i32) {
    %c0_i32 = arith.constant 0 : i32
    %c0_i32_0 = arith.constant 0 : i32
    return %arg0, %arg2, %c0_i32 : i32, i32, i32
  }
  func.func @transform_2(%arg0: i32, %arg1: i32, %arg2: i32) -> (i32, i32, i32) {
    %c0_i32 = arith.constant 0 : i32
    %c0_i32_0 = arith.constant 0 : i32
    return %arg0, %arg2, %c0_i32 : i32, i32, i32
  }
  func.func @transform_3(%arg0: i32, %arg1: i32, %arg2: i32) -> (i32, i32, i32, i32) {
    %c0_i32 = arith.constant 0 : i32
    %c0_i32_0 = arith.constant 0 : i32
    return %arg0, %arg1, %arg2, %c0_i32 : i32, i32, i32, i32
  }
  func.func @transform_4(%arg0: i32, %arg1: i32, %arg2: i32) -> (i32, i32, i32, i32) {
    %c0_i32 = arith.constant 0 : i32
    %c0_i32_0 = arith.constant 0 : i32
    return %arg0, %arg1, %arg2, %c0_i32 : i32, i32, i32, i32
  }
  func.func @transform_5(%arg0: i32, %arg1: i32, %arg2: i32) -> (i32, i32, i32) {
    %c0_i32 = arith.constant 0 : i32
    %c0_i32_0 = arith.constant 0 : i32
    return %arg0, %arg1, %c0_i32 : i32, i32, i32
  }
  func.func @transform_6(%arg0: i32, %arg1: i32, %arg2: i32) -> (i32, i32) {
    %c0_i32 = arith.constant 0 : i32
    return %arg1, %arg2 : i32, i32
  }
  func.func @transform_7(%arg0: i32, %arg1: i32, %arg2: i32) -> (i32, i32, i32) {
    %c0_i32 = arith.constant 0 : i32
    %c0_i32_0 = arith.constant 0 : i32
    return %arg0, %arg1, %c0_i32 : i32, i32, i32
  }
}

</mosaic_0001>

<llo_original>
// kernel: tpu_custom_call.1
$region0: #{tpu_custom_call.1}
  #allocation0 [shape = 'u32[]', space=smem, size = 0x4, offset = 0x4, fixed_abs, tag = 'smem constant byte address 0x4 - core index']
  #allocation1 [shape = 'u32[72,128]{1,0:T(1,128)}', space=vmem, size = 0x9000, scoped, tag = 'internal scratch']
  #allocation2 [shape = 'f32[4,8,1]{2,1,0:T(8,128)}', space=vmem, size = 0x4000, scoped, tag = 'scratch operand']
  #allocation3 [shape = 'f32[4,8,1]{2,1,0:T(8,128)}', space=vmem, size = 0x4000, scoped, tag = 'scratch operand']
  #allocation4 [shape = 'f32[4,8,8]{2,1,0:T(8,128)}', space=vmem, size = 0x4000, scoped, tag = 'scratch operand']
  %s0 = inlined_call_operand.vmem [shape: f32[2,8,32], index: 0, kind: input, shape index: {}]
  %s1 = inlined_call_operand.hbm [shape: f32[2,8,32], index: 1, kind: input, shape index: {}]
  %s2 = inlined_call_operand.hbm [shape: f32[2,8,32], index: 2, kind: input, shape index: {}]
  %s3 = inlined_call_operand.hbm [shape: bf16[2,8,8,32], index: 3, kind: input, shape index: {}]
  %s4 = inlined_call_operand.hbm [shape: bf16[2,8,8,32], index: 4, kind: input, shape index: {}]
  %s5 = inlined_call_operand.vmem [shape: f32[2,8,1], index: 5, kind: input, shape index: {}]
  %s6 = inlined_call_operand.hbm [shape: f32[8,8], index: 6, kind: input, shape index: {}]
  %s7 = inlined_call_operand.hbm [shape: f32[2,8,32], index: 7, kind: output, shape index: {}]
  %s8 = sld [smem:[#allocation0]]
  $region89: #{tpu_custom_call.1} parent=0
    _
  %s10 = ssub.s32 1, %s8
  %s11 = scalar_select 0, %s10, %s8
  $region1: #{tpu_custom_call.1} parent=0
    #allocation5 [shape = 'u8[8192]{0}', space=vmem, size = 0x2000, scoped, tag = 'input window, operand 1']
    #allocation6 [shape = 's32[2]{0}', space=sflag, size = 0x8, scoped, tag = 'scoped memory for tpu_custom_call.1']
    #allocation7 [shape = 's32[2]{0}', space=sflag, size = 0x8, scoped, tag = 'scoped memory for tpu_custom_call.1']
    #allocation8 [shape = 'u8[8192]{0}', space=vmem, size = 0x2000, scoped, tag = 'input window, operand 2']
    #allocation9 [shape = 's32[2]{0}', space=sflag, size = 0x8, scoped, tag = 'scoped memory for tpu_custom_call.1']
    #allocation10 [shape = 'u8[32768]{0}', space=vmem, size = 0x8000, scoped, tag = 'input window, operand 3']
    #allocation11 [shape = 'u8[32768]{0}', space=vmem, size = 0x8000, scoped, tag = 'input window, operand 4']
    #allocation12 [shape = 's32[2]{0}', space=sflag, size = 0x8, scoped, tag = 'scoped memory for tpu_custom_call.1']
    #allocation13 [shape = 'u8[4096]{0}', space=vmem, size = 0x1000, scoped, tag = 'input window, operand 6, single buffered']
    #allocation14 [shape = 'u8[8192]{0}', space=vmem, size = 0x2000, scoped, tag = 'output window, operand 0']
    %12 = vsyncpa [#allocation6], 0
    %s13 = scalar_lea.sflag [#allocation6], 1
    %14 = vsyncpa %s13, 0
    %15 = vsyncpa [#allocation9], 0
    %s16 = scalar_lea.sflag [#allocation9], 1
    %17 = vsyncpa %s16, 0
    %18 = vsyncpa [#allocation12], 0
    %s19 = scalar_lea.sflag [#allocation12], 1
    %20 = vsyncpa %s19, 0
    %21 = vsyncpa [#allocation7], 0
    %s22 = scalar_lea.sflag [#allocation7], 1
    %23 = vsyncpa %s22, 0
    loop: start=0, step=1, limit=4
    $region2: #{tpu_custom_call.1} parent=1 // loop_pre_header
      _
    $region3: #{tpu_custom_call.1} parent=1 // loop_header
      %s25 = sphi 0, %s29
      %p26 = scmp.ge.s32.totalorder %s25, 4
      %s32 = sphi 0, %s51
      %s33 = sphi 0, %s47
      %s34 = sphi 0, %s43
      %s35 = sphi 0, %s32
      %s36 = sphi 0, %s33
      %s37 = sphi 0, %s34
      %s38 = sphi 0, %s35
      %s39 = sphi 0, %s36
      %s40 = sphi 0, %s37
      %s56 = sphi 0, %s58
      %s59 = sphi 0, %s56
      %s60 = sphi 0, %s59
      %s76 = sphi 0, %s60
      %s84 = sphi 0, %s86
      %s87 = sphi 0, %s84
      %s88 = sphi 0, %s87
      %s104 = sphi 0, %s88
      %s112 = sphi 0, %s114
      %s115 = sphi 0, %s112
      %s116 = sphi 0, %s115
      %s132 = sphi 0, %s116
      %s142 = sphi 0, %s144
      %s145 = sphi 0, %s142
      %s146 = sphi 0, %s145
      %s162 = sphi 0, %s146
      %s172 = sphi 0, %s174
      %s175 = sphi 0, %s172
      %s176 = sphi 0, %s175
      %s192 = sphi 0, %s176
      %s200 = sphi 0, %s202
      %s203 = sphi 0, %s200
      %s204 = sphi 0, %s203
      %s220 = sphi 0, %s204
      %s228 = sphi 0, %s230
      %s231 = sphi 0, %s228
      %s232 = sphi 0, %s231
      %s248 = sphi 0, %s232
      %s256 = sphi 0, %s258
      %s259 = sphi 0, %s256
      %s260 = sphi 0, %s259
      %s276 = sphi 0, %s260
    $region4: #{tpu_custom_call.1} parent=1 // loop_header_branch
      %28 = sbr.rel (%p26) target = $region8
    $region5: #{tpu_custom_call.1} parent=1 // loop_body
      %s30 = ssub.s32 %s25, 1
      %s31 = ssub.s32 %s25, 2
      %s41 = sadd.s32 1, %s34
      %p42 = scmp.ge.s32.totalorder %s41, 1
      %s43 = scalar_select %p42, 0, %s41
      %s44 = sadd.s32 1, %s33
      %s45 = scalar_select %p42, %s44, %s33
      %p46 = scmp.ge.s32.totalorder %s45, 1
      %s47 = scalar_select %p46, 0, %s45
      %s48 = sadd.s32 1, %s32
      %s49 = scalar_select %p46, %s48, %s32
      %p50 = scmp.ge.s32.totalorder %s49, 2
      %s51 = scalar_select %p50, 0, %s49
      %s52 = ssub.s32 %s32, %s51
      %s53 = ssub.s32 %s33, %s47
      %s54 = sor.u32 %s52, %s53
      %p55 = scmp.eq.s32.totalorder %s54, 0
      %s57 = sadd.s32 %s56, 1
      %s58 = scalar_select %p55, %s56, %s57
      %p61 = pneg %p55
      %p62 = scmp.eq.s32.totalorder %s25, 1
      %p63 = por %p61, %p62
      %p64 = scmp.ne.s32.totalorder %s56, %s59
      %p65 = scmp.eq.s32.totalorder %s25, 0
      %p66 = por %p64, %p65
      %p67 = scmp.ne.s32.totalorder %s56, %s59
      %p68 = scmp.eq.s32.totalorder %s30, 1
      %p69 = por %p67, %p68
      %p70 = scmp.ne.s32.totalorder %s59, %s60
      %p71 = scmp.eq.s32.totalorder %s30, 0
      %p72 = por %p70, %p71
      %p73 = scmp.ne.s32.totalorder %s59, %s60
      %p74 = scmp.eq.s32.totalorder %s31, 1
      %p75 = por %p73, %p74
      %p77 = scmp.ne.s32.totalorder %s60, %s76
      %p78 = scmp.eq.s32.totalorder %s31, 0
      %p79 = por %p77, %p78
      %s80 = ssub.s32 %s32, %s51
      %s81 = ssub.s32 %s34, %s43
      %s82 = sor.u32 %s80, %s81
      %p83 = scmp.eq.s32.totalorder %s82, 0
      %s85 = sadd.s32 %s84, 1
      %s86 = scalar_select %p83, %s84, %s85
      %p89 = pneg %p83
      %p90 = scmp.eq.s32.totalorder %s25, 1
      %p91 = por %p89, %p90
      %p92 = scmp.ne.s32.totalorder %s84, %s87
      %p93 = scmp.eq.s32.totalorder %s25, 0
      %p94 = por %p92, %p93
      %p95 = scmp.ne.s32.totalorder %s84, %s87
      %p96 = scmp.eq.s32.totalorder %s30, 1
      %p97 = por %p95, %p96
      %p98 = scmp.ne.s32.totalorder %s87, %s88
      %p99 = scmp.eq.s32.totalorder %s30, 0
      %p100 = por %p98, %p99
      %p101 = scmp.ne.s32.totalorder %s87, %s88
      %p102 = scmp.eq.s32.totalorder %s31, 1
      %p103 = por %p101, %p102
      %p105 = scmp.ne.s32.totalorder %s88, %s104
      %p106 = scmp.eq.s32.totalorder %s31, 0
      %p107 = por %p105, %p106
      %s108 = ssub.s32 %s32, %s51
      %s109 = ssub.s32 %s34, %s43
      %s110 = sor.u32 %s108, %s109
      %p111 = scmp.eq.s32.totalorder %s110, 0
      %s113 = sadd.s32 %s112, 1
      %s114 = scalar_select %p111, %s112, %s113
      %p117 = pneg %p111
      %p118 = scmp.eq.s32.totalorder %s25, 1
      %p119 = por %p117, %p118
      %p120 = scmp.ne.s32.totalorder %s112, %s115
      %p121 = scmp.eq.s32.totalorder %s25, 0
      %p122 = por %p120, %p121
      %p123 = scmp.ne.s32.totalorder %s112, %s115
      %p124 = scmp.eq.s32.totalorder %s30, 1
      %p125 = por %p123, %p124
      %p126 = scmp.ne.s32.totalorder %s115, %s116
      %p127 = scmp.eq.s32.totalorder %s30, 0
      %p128 = por %p126, %p127
      %p129 = scmp.ne.s32.totalorder %s115, %s116
      %p130 = scmp.eq.s32.totalorder %s31, 1
      %p131 = por %p129, %p130
      %p133 = scmp.ne.s32.totalorder %s116, %s132
      %p134 = scmp.eq.s32.totalorder %s31, 0
      %p135 = por %p133, %p134
      %s136 = ssub.s32 %s32, %s51
      %s137 = ssub.s32 %s33, %s47
      %s138 = sor.u32 %s136, %s137
      %s139 = ssub.s32 %s34, %s43
      %s140 = sor.u32 %s138, %s139
      %p141 = scmp.eq.s32.totalorder %s140, 0
      %s143 = sadd.s32 %s142, 1
      %s144 = scalar_select %p141, %s142, %s143
      %p147 = pneg %p141
      %p148 = scmp.eq.s32.totalorder %s25, 1
      %p149 = por %p147, %p148
      %p150 = scmp.ne.s32.totalorder %s142, %s145
      %p151 = scmp.eq.s32.totalorder %s25, 0
      %p152 = por %p150, %p151
      %p153 = scmp.ne.s32.totalorder %s142, %s145
      %p154 = scmp.eq.s32.totalorder %s30, 1
      %p155 = por %p153, %p154
      %p156 = scmp.ne.s32.totalorder %s145, %s146
      %p157 = scmp.eq.s32.totalorder %s30, 0
      %p158 = por %p156, %p157
      %p159 = scmp.ne.s32.totalorder %s145, %s146
      %p160 = scmp.eq.s32.totalorder %s31, 1
      %p161 = por %p159, %p160
      %p163 = scmp.ne.s32.totalorder %s146, %s162
      %p164 = scmp.eq.s32.totalorder %s31, 0
      %p165 = por %p163, %p164
      %s166 = ssub.s32 %s32, %s51
      %s167 = ssub.s32 %s33, %s47
      %s168 = sor.u32 %s166, %s167
      %s169 = ssub.s32 %s34, %s43
      %s170 = sor.u32 %s168, %s169
      %p171 = scmp.eq.s32.totalorder %s170, 0
      %s173 = sadd.s32 %s172, 1
      %s174 = scalar_select %p171, %s172, %s173
      %p177 = pneg %p171
      %p178 = scmp.eq.s32.totalorder %s25, 1
      %p179 = por %p177, %p178
      %p180 = scmp.ne.s32.totalorder %s172, %s175
      %p181 = scmp.eq.s32.totalorder %s25, 0
      %p182 = por %p180, %p181
      %p183 = scmp.ne.s32.totalorder %s172, %s175
      %p184 = scmp.eq.s32.totalorder %s30, 1
      %p185 = por %p183, %p184
      %p186 = scmp.ne.s32.totalorder %s175, %s176
      %p187 = scmp.eq.s32.totalorder %s30, 0
      %p188 = por %p186, %p187
      %p189 = scmp.ne.s32.totalorder %s175, %s176
      %p190 = scmp.eq.s32.totalorder %s31, 1
      %p191 = por %p189, %p190
      %p193 = scmp.ne.s32.totalorder %s176, %s192
      %p194 = scmp.eq.s32.totalorder %s31, 0
      %p195 = por %p193, %p194
      %s196 = ssub.s32 %s32, %s51
      %s197 = ssub.s32 %s33, %s47
      %s198 = sor.u32 %s196, %s197
      %p199 = scmp.eq.s32.totalorder %s198, 0
      %s201 = sadd.s32 %s200, 1
      %s202 = scalar_select %p199, %s200, %s201
      %p205 = pneg %p199
      %p206 = scmp.eq.s32.totalorder %s25, 1
      %p207 = por %p205, %p206
      %p208 = scmp.ne.s32.totalorder %s200, %s203
      %p209 = scmp.eq.s32.totalorder %s25, 0
      %p210 = por %p208, %p209
      %p211 = scmp.ne.s32.totalorder %s200, %s203
      %p212 = scmp.eq.s32.totalorder %s30, 1
      %p213 = por %p211, %p212
      %p214 = scmp.ne.s32.totalorder %s203, %s204
      %p215 = scmp.eq.s32.totalorder %s30, 0
      %p216 = por %p214, %p215
      %p217 = scmp.ne.s32.totalorder %s203, %s204
      %p218 = scmp.eq.s32.totalorder %s31, 1
      %p219 = por %p217, %p218
      %p221 = scmp.ne.s32.totalorder %s204, %s220
      %p222 = scmp.eq.s32.totalorder %s31, 0
      %p223 = por %p221, %p222
      %s224 = ssub.s32 %s33, %s47
      %s225 = ssub.s32 %s34, %s43
      %s226 = sor.u32 %s224, %s225
      %p227 = scmp.eq.s32.totalorder %s226, 0
      %s229 = sadd.s32 %s228, 1
      %s230 = scalar_select %p227, %s228, %s229
      %p233 = pneg %p227
      %p234 = scmp.eq.s32.totalorder %s25, 1
      %p235 = por %p233, %p234
      %p236 = scmp.ne.s32.totalorder %s228, %s231
      %p237 = scmp.eq.s32.totalorder %s25, 0
      %p238 = por %p236, %p237
      %p239 = scmp.ne.s32.totalorder %s228, %s231
      %p240 = scmp.eq.s32.totalorder %s30, 1
      %p241 = por %p239, %p240
      %p242 = scmp.ne.s32.totalorder %s231, %s232
      %p243 = scmp.eq.s32.totalorder %s30, 0
      %p244 = por %p242, %p243
      %p245 = scmp.ne.s32.totalorder %s231, %s232
      %p246 = scmp.eq.s32.totalorder %s31, 1
      %p247 = por %p245, %p246
      %p249 = scmp.ne.s32.totalorder %s232, %s248
      %p250 = scmp.eq.s32.totalorder %s31, 0
      %p251 = por %p249, %p250
      %s252 = ssub.s32 %s32, %s51
      %s253 = ssub.s32 %s33, %s47
      %s254 = sor.u32 %s252, %s253
      %p255 = scmp.eq.s32.totalorder %s254, 0
      %s257 = sadd.s32 %s256, 1
      %s258 = scalar_select %p255, %s256, %s257
      %p261 = pneg %p255
      %p262 = scmp.eq.s32.totalorder %s25, 1
      %p263 = por %p261, %p262
      %p264 = scmp.ne.s32.totalorder %s256, %s259
      %p265 = scmp.eq.s32.totalorder %s25, 0
      %p266 = por %p264, %p265
      %p267 = scmp.ne.s32.totalorder %s256, %s259
      %p268 = scmp.eq.s32.totalorder %s30, 1
      %p269 = por %p267, %p268
      %p270 = scmp.ne.s32.totalorder %s259, %s260
      %p271 = scmp.eq.s32.totalorder %s30, 0
      %p272 = por %p270, %p271
      %p273 = scmp.ne.s32.totalorder %s259, %s260
      %p274 = scmp.eq.s32.totalorder %s31, 1
      %p275 = por %p273, %p274
      %p277 = scmp.ne.s32.totalorder %s260, %s276
      %p278 = scmp.eq.s32.totalorder %s31, 0
      %p279 = por %p277, %p278
      %p280 = scmp.le.s32.totalorder 1, %s25
      %p281 = scmp.lt.s32.totalorder %s25, 3
      %p282 = pnand %p280, %p281
      %p283 = pneg %p282
      // Predicated region
      $region9: #{tpu_custom_call.1} parent=5 // pred_check
        _
      $region10: #{tpu_custom_call.1} parent=5 // pred_check_branch
        %285 = sbr.rel (%p282) target = $region12
      $region11: #{tpu_custom_call.1} parent=5 // pred_region
        %s286 = ssub.s32 %s25, 1
        // Predicated region
        $region13: #{tpu_custom_call.1} parent=11 // pred_check
          %p287 = pneg %p244
        $region14: #{tpu_custom_call.1} parent=11 // pred_check_branch
          %289 = sbr.rel (%p287) target = $region16
        $region15: #{tpu_custom_call.1} parent=11 // pred_region
          %291 = vsyncadd [#allocation12], 0
          %s292 = sadd.s32 %s37, %s36
          %s293 = smul.addr %s292, 8
          %s294 = scalar_lea.hbm %s6, %s293
          %s296 = sshll.u32 %s294, 4
          %s297 = int_to_ptr.hbm [resolvable:$true] %s296
          %s298 = sshll.u32 [#allocation13], 4
          %s299 = int_to_ptr.vmem [resolvable:$true] %s298
          %301 = dma.hbm_to_vmem [thread:$0]  %s297, 128, %s299, [#allocation12]
        $region16: #{tpu_custom_call.1} parent=11 // pred_fallthru
          _
      $region12: #{tpu_custom_call.1} parent=5 // pred_fallthru
        _
      %p302 = scmp.lt.s32.totalorder %s25, 2
      // Predicated region
      $region17: #{tpu_custom_call.1} parent=5 // pred_check
        %p303 = pneg %p302
      $region18: #{tpu_custom_call.1} parent=5 // pred_check_branch
        %305 = sbr.rel (%p303) target = $region20
      $region19: #{tpu_custom_call.1} parent=5 // pred_region
        // Predicated region
        $region21: #{tpu_custom_call.1} parent=19 // pred_check
          %p306 = pneg %p66
        $region22: #{tpu_custom_call.1} parent=19 // pred_check_branch
          %308 = sbr.rel (%p306) target = $region24
        $region23: #{tpu_custom_call.1} parent=19 // pred_region
          %p309 = scmp.lt.s32.totalorder %s32, 1
          %s310 = scalar_select %p309, %s32, 1
          %p311 = scmp.lt.s32.totalorder %s33, 0
          %s312 = scalar_select %p311, %s33, 0
          %s313 = sadd.s32 %s312, %s310
          %s314 = smul.addr %s313, 8
          %s315 = scalar_lea.vmem %s0, %s314
        $region24: #{tpu_custom_call.1} parent=19 // pred_fallthru
          _
        // Predicated region
        $region25: #{tpu_custom_call.1} parent=19 // pred_check
          %p316 = pneg %p94
        $region26: #{tpu_custom_call.1} parent=19 // pred_check_branch
          %318 = sbr.rel (%p316) target = $region28
        $region27: #{tpu_custom_call.1} parent=19 // pred_region
          %s319 = sand.u32 %s84, 1
          %s320 = scalar_lea.sflag [#allocation6], %s319
          %s321 = sand.u32 %s84, 1
          %s322 = smul.addr %s321, 8
          %s323 = scalar_lea.vmem [#allocation5], %s322
          %325 = vsyncadd %s320, 0
          %s326 = sadd.s32 %s34, %s32
          %s327 = smul.addr %s326, 8
          %s328 = scalar_lea.hbm %s1, %s327
          %s330 = sshll.u32 %s328, 4
          %s331 = int_to_ptr.hbm [resolvable:$true] %s330
          %s332 = sshll.u32 %s323, 4
          %s333 = int_to_ptr.vmem [resolvable:$true] %s332
          %335 = dma.hbm_to_vmem [thread:$0]  %s331, 128, %s333, %s320
        $region28: #{tpu_custom_call.1} parent=19 // pred_fallthru
          _
        // Predicated region
        $region29: #{tpu_custom_call.1} parent=19 // pred_check
          %p336 = pneg %p122
        $region30: #{tpu_custom_call.1} parent=19 // pred_check_branch
          %338 = sbr.rel (%p336) target = $region32
        $region31: #{tpu_custom_call.1} parent=19 // pred_region
          %s339 = sand.u32 %s25, 1
          %s340 = scalar_lea.sflag [#allocation9], %s339
          %s341 = sand.u32 %s112, 1
          %s342 = smul.addr %s341, 8
          %s343 = scalar_lea.vmem [#allocation8], %s342
          %345 = vsyncadd %s340, 0
          %s346 = sadd.s32 %s34, %s32
          %s347 = smul.addr %s346, 8
          %s348 = scalar_lea.hbm %s2, %s347
          %s350 = sshll.u32 %s348, 4
          %s351 = int_to_ptr.hbm [resolvable:$true] %s350
          %s352 = sshll.u32 %s343, 4
          %s353 = int_to_ptr.vmem [resolvable:$true] %s352
          %355 = dma.hbm_to_vmem [thread:$0]  %s351, 128, %s353, %s340
        $region32: #{tpu_custom_call.1} parent=19 // pred_fallthru
          _
        // Predicated region
        $region33: #{tpu_custom_call.1} parent=19 // pred_check
          %p356 = pneg %p152
        $region34: #{tpu_custom_call.1} parent=19 // pred_check_branch
          %358 = sbr.rel (%p356) target = $region36
        $region35: #{tpu_custom_call.1} parent=19 // pred_region
          %s359 = sand.u32 %s25, 1
          %s360 = scalar_lea.sflag [#allocation9], %s359
          %s361 = sand.u32 %s142, 1
          %s362 = smul.addr %s361, 32
          %s363 = scalar_lea.vmem [#allocation10], %s362
          %s364 = smul.u32 8, %s33
          %366 = vsyncadd %s360, 0
          %s367 = sadd.s32 %s34, %s364
          %s368 = smul.addr %s32, 8
          %s369 = sadd.s32 %s367, %s368
          %s370 = smul.addr %s369, 4
          %s371 = scalar_lea.hbm %s3, %s370
          %s372 = sshll.u32 %s371, 4
          %s373 = int_to_ptr.hbm [resolvable:$true] %s372
          %s374 = sshll.u32 %s363, 4
          %s375 = int_to_ptr.vmem [resolvable:$true] %s374
          %380 = dma.hbm_to_vmem [thread:$0]  %s373, 512, %s375, %s360, 64, 64, 4
        $region36: #{tpu_custom_call.1} parent=19 // pred_fallthru
          _
        // Predicated region
        $region37: #{tpu_custom_call.1} parent=19 // pred_check
          %p381 = pneg %p182
        $region38: #{tpu_custom_call.1} parent=19 // pred_check_branch
          %383 = sbr.rel (%p381) target = $region40
        $region39: #{tpu_custom_call.1} parent=19 // pred_region
          %s384 = sand.u32 %s25, 1
          %s385 = scalar_lea.sflag [#allocation12], %s384
          %s386 = sand.u32 %s172, 1
          %s387 = smul.addr %s386, 32
          %s388 = scalar_lea.vmem [#allocation11], %s387
          %s389 = smul.u32 8, %s33
          %391 = vsyncadd %s385, 0
          %s392 = sadd.s32 %s34, %s389
          %s393 = smul.addr %s32, 8
          %s394 = sadd.s32 %s392, %s393
          %s395 = smul.addr %s394, 4
          %s396 = scalar_lea.hbm %s4, %s395
          %s397 = sshll.u32 %s396, 4
          %s398 = int_to_ptr.hbm [resolvable:$true] %s397
          %s399 = sshll.u32 %s388, 4
          %s400 = int_to_ptr.vmem [resolvable:$true] %s399
          %405 = dma.hbm_to_vmem [thread:$0]  %s398, 512, %s400, %s385, 64, 64, 4
        $region40: #{tpu_custom_call.1} parent=19 // pred_fallthru
          _
        // Predicated region
        $region41: #{tpu_custom_call.1} parent=19 // pred_check
          %p406 = pneg %p210
        $region42: #{tpu_custom_call.1} parent=19 // pred_check_branch
          %408 = sbr.rel (%p406) target = $region44
        $region43: #{tpu_custom_call.1} parent=19 // pred_region
          %p409 = scmp.lt.s32.totalorder %s32, 1
          %s410 = scalar_select %p409, %s32, 1
          %p411 = scmp.lt.s32.totalorder %s33, 0
          %s412 = scalar_select %p411, %s33, 0
          %s413 = sadd.s32 %s412, %s410
          %s414 = smul.addr %s413, 8
          %s415 = scalar_lea.vmem %s5, %s414
        $region44: #{tpu_custom_call.1} parent=19 // pred_fallthru
          _
      $region20: #{tpu_custom_call.1} parent=5 // pred_fallthru
        _
      %p416 = scmp.le.s32.totalorder 1, %s25
      %p417 = scmp.lt.s32.totalorder %s25, 3
      %p418 = pnand %p416, %p417
      %p419 = pneg %p418
      // Predicated region
      $region45: #{tpu_custom_call.1} parent=5 // pred_check
        _
      $region46: #{tpu_custom_call.1} parent=5 // pred_check_branch
        %421 = sbr.rel (%p418) target = $region48
      $region47: #{tpu_custom_call.1} parent=5 // pred_region
        %s422 = ssub.s32 %s25, 1
        %s423 = sand.u32 %s87, 1
        %s424 = scalar_lea.sflag [#allocation6], %s423
        %s425 = sand.u32 %s87, 1
        %s426 = smul.addr %s425, 8
        %s427 = scalar_lea.vmem [#allocation5], %s426
        // Predicated region
        $region49: #{tpu_custom_call.1} parent=47 // pred_check
          %p428 = pneg %p100
        $region50: #{tpu_custom_call.1} parent=47 // pred_check_branch
          %430 = sbr.rel (%p428) target = $region52
        $region51: #{tpu_custom_call.1} parent=47 // pred_region
          %432 = dma.done %s424, 128
        $region52: #{tpu_custom_call.1} parent=47 // pred_fallthru
          _
        %s433 = sand.u32 %s30, 1
        %s434 = scalar_lea.sflag [#allocation9], %s433
        %s435 = sand.u32 %s115, 1
        %s436 = smul.addr %s435, 8
        %s437 = scalar_lea.vmem [#allocation8], %s436
        // Predicated region
        $region53: #{tpu_custom_call.1} parent=47 // pred_check
          %p438 = pneg %p128
        $region54: #{tpu_custom_call.1} parent=47 // pred_check_branch
          %440 = sbr.rel (%p438) target = $region56
        $region55: #{tpu_custom_call.1} parent=47 // pred_region
          %442 = dma.done %s434, 128
        $region56: #{tpu_custom_call.1} parent=47 // pred_fallthru
          _
        %s443 = sand.u32 %s30, 1
        %s444 = scalar_lea.sflag [#allocation9], %s443
        %s445 = sand.u32 %s145, 1
        %s446 = smul.addr %s445, 32
        %s447 = scalar_lea.vmem [#allocation10], %s446
        // Predicated region
        $region57: #{tpu_custom_call.1} parent=47 // pred_check
          %p448 = pneg %p158
        $region58: #{tpu_custom_call.1} parent=47 // pred_check_branch
          %450 = sbr.rel (%p448) target = $region60
        $region59: #{tpu_custom_call.1} parent=47 // pred_region
          %452 = dma.done %s444, 512
        $region60: #{tpu_custom_call.1} parent=47 // pred_fallthru
          _
        %s453 = sand.u32 %s30, 1
        %s454 = scalar_lea.sflag [#allocation12], %s453
        %s455 = sand.u32 %s175, 1
        %s456 = smul.addr %s455, 32
        %s457 = scalar_lea.vmem [#allocation11], %s456
        // Predicated region
        $region61: #{tpu_custom_call.1} parent=47 // pred_check
          %p458 = pneg %p188
        $region62: #{tpu_custom_call.1} parent=47 // pred_check_branch
          %460 = sbr.rel (%p458) target = $region64
        $region63: #{tpu_custom_call.1} parent=47 // pred_region
          %462 = dma.done %s454, 512
        $region64: #{tpu_custom_call.1} parent=47 // pred_fallthru
          _
        // Predicated region
        $region65: #{tpu_custom_call.1} parent=47 // pred_check
          %p463 = pneg %p244
        $region66: #{tpu_custom_call.1} parent=47 // pred_check_branch
          %465 = sbr.rel (%p463) target = $region68
        $region67: #{tpu_custom_call.1} parent=47 // pred_region
          %467 = dma.done [#allocation12], 128
        $region68: #{tpu_custom_call.1} parent=47 // pred_fallthru
          _
        %p468 = scmp.lt.s32.totalorder %s35, 1
        %s469 = scalar_select %p468, %s35, 1
        %p470 = scmp.lt.s32.totalorder %s36, 0
        %s471 = scalar_select %p470, %s36, 0
        %s472 = sadd.s32 %s471, %s469
        %s473 = smul.addr %s472, 8
        %s474 = scalar_lea.vmem %s0, %s473
        %p475 = pneg %p72
        %p476 = pneg %p69
        %s477 = sand.u32 %s87, 1
        %s478 = scalar_lea.sflag [#allocation6], %s477
        %s479 = sand.u32 %s87, 1
        %s480 = smul.addr %s479, 8
        %s481 = scalar_lea.vmem [#allocation5], %s480
        %p482 = pneg %p100
        %p483 = pneg %p97
        %s484 = sand.u32 %s30, 1
        %s485 = scalar_lea.sflag [#allocation9], %s484
        %s486 = sand.u32 %s115, 1
        %s487 = smul.addr %s486, 8
        %s488 = scalar_lea.vmem [#allocation8], %s487
        %p489 = pneg %p128
        %p490 = pneg %p125
        %s491 = sand.u32 %s30, 1
        %s492 = scalar_lea.sflag [#allocation9], %s491
        %s493 = sand.u32 %s145, 1
        %s494 = smul.addr %s493, 32
        %s495 = scalar_lea.vmem [#allocation10], %s494
        %p496 = pneg %p158
        %p497 = pneg %p155
        %s498 = sand.u32 %s30, 1
        %s499 = scalar_lea.sflag [#allocation12], %s498
        %s500 = sand.u32 %s175, 1
        %s501 = smul.addr %s500, 32
        %s502 = scalar_lea.vmem [#allocation11], %s501
        %p503 = pneg %p188
        %p504 = pneg %p185
        %p505 = scmp.lt.s32.totalorder %s35, 1
        %s506 = scalar_select %p505, %s35, 1
        %p507 = scmp.lt.s32.totalorder %s36, 0
        %s508 = scalar_select %p507, %s36, 0
        %s509 = sadd.s32 %s508, %s506
        %s510 = smul.addr %s509, 8
        %s511 = scalar_lea.vmem %s5, %s510
        %p512 = pneg %p216
        %p513 = pneg %p213
        %p514 = pneg %p244
        %p515 = pneg %p241
        %p516 = pneg %p272
        %p517 = pneg %p269
        %s518 = sand.u32 %s259, 1
        %s519 = scalar_lea.sflag [#allocation7], %s518
        %s520 = sand.u32 %s259, 1
        %s521 = smul.addr %s520, 8
        %s522 = scalar_lea.vmem [#allocation14], %s521
        %p523 = scmp.lt.s32.totalorder %s35, 1
        %s524 = scalar_select %p523, %s35, 1
        %p525 = scmp.lt.s32.totalorder %s36, 0
        %s526 = scalar_select %p525, %s36, 0
        %s527 = sadd.s32 %s526, %s524
        %s528 = smul.addr %s527, 8
        %s529 = scalar_lea.vmem %s0, %s528
        %s530 = smul.u32 8, %s36
        %s531 = smul.u32 8, %s36
        %p532 = scmp.lt.s32.totalorder %s35, 1
        %s533 = scalar_select %p532, %s35, 1
        %p534 = scmp.lt.s32.totalorder %s36, 0
        %s535 = scalar_select %p534, %s36, 0
        %s536 = sadd.s32 %s535, %s533
        %s537 = smul.addr %s536, 8
        %s538 = scalar_lea.vmem %s5, %s537
        %p539 = scmp.eq.s32.totalorder %s37, 0
        // Predicated region
        $region69: #{tpu_custom_call.1} parent=47 // pred_check
          %p540 = pneg %p539
        $region70: #{tpu_custom_call.1} parent=47 // pred_check_branch
          %542 = sbr.rel (%p540) target = $region72
        $region71: #{tpu_custom_call.1} parent=47 // pred_region
          %vm543 = vcmask 7168
          %544 = vst.msk [vmem:[#allocation2] sm:$0xff] %vm543, -inf
          %545 = vst.msk [vmem:[#allocation2 + $0x8] sm:$0xff] %vm543, -inf
          %546 = vst.msk [vmem:[#allocation2 + $0x10] sm:$0xff] %vm543, -inf
          %547 = vst.msk [vmem:[#allocation2 + $0x18] sm:$0xff] %vm543, -inf
          %548 = vst.msk [vmem:[#allocation3] sm:$0xff] %vm543, 0.0
          %549 = vst.msk [vmem:[#allocation3 + $0x8] sm:$0xff] %vm543, 0.0
          %550 = vst.msk [vmem:[#allocation3 + $0x10] sm:$0xff] %vm543, 0.0
          %551 = vst.msk [vmem:[#allocation3 + $0x18] sm:$0xff] %vm543, 0.0
          %vm552 = vcmask 64512
          %553 = vst.msk [vmem:[#allocation4] sm:$0xff] %vm552, 0.0
          %554 = vst.msk [vmem:[#allocation4 + $0x8] sm:$0xff] %vm552, 0.0
          %555 = vst.msk [vmem:[#allocation4 + $0x10] sm:$0xff] %vm552, 0.0
          %556 = vst.msk [vmem:[#allocation4 + $0x18] sm:$0xff] %vm552, 0.0
        $region72: #{tpu_custom_call.1} parent=47 // pred_fallthru
          _
        %v557 = vld [vmem:[%s538] sm:$0xff]
        %vm558 = vcmp.gt.f32.partialorder %v557, 0.0
        %v559 = vld [vmem:[#allocation13] sm:$0xff]
        %vm560 = vcmp.gt.f32.partialorder %v559, 0.0
        %v561 = vsel %vm558, 1, 0
        %562 = vset.pattern.permute.xlu0 0
        %563 = vperm.xlu0 %562, %v561
        %v564 = vpop.permute.xlu0 %563
        %vm565 = vcmp.eq.s32.totalorder %v564, 1
        %vm566 = vmor %vm565, %vm560
        %v567 = vld [vmem:[%s529] sm:$0xff]
        %v568 = vld [vmem:[%s427] sm:$0xff]
        %v569 = vld [vmem:[%s437] sm:$0xff]
        %v570 = vld [vmem:[%s447] sm:$0xf]
        %v571 = vld [vmem:[%s447 + $0x4] sm:$0xf]
        %v572 = vld [vmem:[%s447 + $0x8] sm:$0xf]
        %v573 = vld [vmem:[%s447 + $0xc] sm:$0xf]
        %v574 = vld [vmem:[%s447 + $0x10] sm:$0xf]
        %v575 = vld [vmem:[%s447 + $0x14] sm:$0xf]
        %v576 = vld [vmem:[%s447 + $0x18] sm:$0xf]
        %v577 = vld [vmem:[%s447 + $0x1c] sm:$0xf]
        %v578 = vunpack.c.l.bf16 %v570
        %v579 = vunpack.c.l.bf16 %v571
        %v580 = vunpack.c.l.bf16 %v572
        %v581 = vunpack.c.l.bf16 %v573
        %v582 = vunpack.c.l.bf16 %v574
        %v583 = vunpack.c.l.bf16 %v575
        %v584 = vunpack.c.l.bf16 %v576
        %v585 = vunpack.c.l.bf16 %v577
        %v587 = vrot.slane %v567, 1
        %v588 = vrot.slane %v567, 2
        %v589 = vrot.slane %v567, 3
        %v590 = vrot.slane %v567, 4
        %v591 = vrot.slane %v567, 5
        %v592 = vrot.slane %v567, 6
        %v593 = vrot.slane %v567, 7
        %v594 = vperm.slane %v567, 0
        %v595 = vperm.slane %v587, 0
        %v596 = vperm.slane %v588, 0
        %v597 = vperm.slane %v589, 0
        %v598 = vperm.slane %v590, 0
        %v599 = vperm.slane %v591, 0
        %v600 = vperm.slane %v592, 0
        %v601 = vperm.slane %v593, 0
        %v610 = vmul.f32 %v578, %v594
        %v611 = vmul.f32 %v579, %v595
        %v612 = vmul.f32 %v580, %v596
        %v613 = vmul.f32 %v581, %v597
        %v614 = vmul.f32 %v582, %v598
        %v615 = vmul.f32 %v583, %v599
        %v616 = vmul.f32 %v584, %v600
        %v617 = vmul.f32 %v585, %v601
        %vm618 = vcmask 64512
        %v619 = vsel %vm618, %v610, 0.0
        %620 = vadd.xlane.f32.xlu0 %v619
        %v621 = vpop.xlane.xlu0 %620
        %v622 = vsel %vm618, %v611, 0.0
        %623 = vadd.xlane.f32.xlu0 %v622
        %v624 = vpop.xlane.xlu0 %623
        %v625 = vsel %vm618, %v612, 0.0
        %626 = vadd.xlane.f32.xlu0 %v625
        %v627 = vpop.xlane.xlu0 %626
        %v628 = vsel %vm618, %v613, 0.0
        %629 = vadd.xlane.f32.xlu0 %v628
        %v630 = vpop.xlane.xlu0 %629
        %v631 = vsel %vm618, %v614, 0.0
        %632 = vadd.xlane.f32.xlu0 %v631
        %v633 = vpop.xlane.xlu0 %632
        %v634 = vsel %vm618, %v615, 0.0
        %635 = vadd.xlane.f32.xlu0 %v634
        %v636 = vpop.xlane.xlu0 %635
        %v637 = vsel %vm618, %v616, 0.0
        %638 = vadd.xlane.f32.xlu0 %v637
        %v639 = vpop.xlane.xlu0 %638
        %v640 = vsel %vm618, %v617, 0.0
        %641 = vadd.xlane.f32.xlu0 %v640
        %v642 = vpop.xlane.xlu0 %641
        %v651 = vlaneseq
        %v652 = vand.u32 %v651, 127
        %v653 = vperm.slane %v621, %v652
        %v654 = vperm.slane %v624, %v652
        %v655 = vperm.slane %v627, %v652
        %v656 = vperm.slane %v630, %v652
        %v657 = vperm.slane %v633, %v652
        %v658 = vperm.slane %v636, %v652
        %v659 = vperm.slane %v639, %v652
        %v660 = vperm.slane %v642, %v652
        %vm661 = vcmask 1041409
        %v662 = vsel %vm661, %v654, %v653
        %vm663 = vcmask 1042434
        %v664 = vsel %vm663, %v655, %v662
        %vm665 = vcmask 1043459
        %v666 = vsel %vm665, %v656, %v664
        %vm667 = vcmask 1044484
        %v668 = vsel %vm667, %v657, %v666
        %vm669 = vcmask 1045509
        %v670 = vsel %vm669, %v658, %v668
        %vm671 = vcmask 1046534
        %v672 = vsel %vm671, %v659, %v670
        %vm673 = vcmask 1047559
        %v674 = vsel %vm673, %v660, %v672
        %v676 = vsel %vm618, %v567, 0
        %v679 = vsel %vm618, %v568, 0
        %681 = vmatpush.xpose.msra.mxu0 0.0
        %682 = vmatpush.xpose.msra.mxu0 0.0
        %683 = vmatpush.xpose.msra.mxu0 0.0
        %684 = vmatpush.xpose.msra.mxu0 0.0
        %685 = vmatpush.xpose.msra.mxu0 0.0
        %686 = vmatpush.xpose.msra.mxu0 0.0
        %687 = vmatpush.xpose.msra.mxu0 0.0
        %688 = vmatpush.xpose.msra.mxu0 0.0
        %689 = vmatpush.xpose.msra.mxu0 0.0
        %690 = vmatpush.xpose.msra.mxu0 0.0
        %691 = vmatpush.xpose.msra.mxu0 0.0
        %692 = vmatpush.xpose.msra.mxu0 0.0
        %693 = vmatpush.xpose.msra.mxu0 0.0
        %694 = vmatpush.xpose.msra.mxu0 0.0
        %695 = vmatpush.xpose.msra.mxu0 0.0
        %696 = vmatpush.xpose.msra.mxu0 %v679
        %697 = vmatmul.f32.gmra.mxu0 %v676
        %v698 = vpop.f32.mrf.mxu0
        %v699 = vadd.f32 %v674, %v698
        %700 = vdwg.mxu0
        %v701 = vsel %vm566, -4.2949673e+09, %v699
        %v702 = vld [vmem:[#allocation2] sm:$0xff]
        %v703 = vsel %vm618, %v701, -inf
        %704 = vmax.xlane.f32.xlu0 %v703
        %v705 = vpop.xlane.xlu0 %704
        %v706 = vmax.f32 %v702, %v705
        %v707 = vsub.f32 %v702, %v706
        %v708 = vmul.f32 %v707, 1.442695
        %v709 = vpow.pop %v708
        %711 = vset.pattern.permute.xlu0 0
        %712 = vperm.xlu0 %711, %v706
        %v713 = vpop.permute.xlu0 %712
        %v715 = vsub.f32 %v701, %v713
        %v716 = vmul.f32 %v715, 1.442695
        %v717 = vpow.pop %v716
        %v718 = vld [vmem:[#allocation3] sm:$0xff]
        %v719 = vmul.f32 %v709, %v718
        %v720 = vsel %vm618, %v717, 0.0
        %721 = vadd.xlane.f32.xlu0 %v720
        %v722 = vpop.xlane.xlu0 %721
        %v723 = vadd.f32 %v719, %v722
        %vm724 = vcmask 7168
        %725 = vst.msk [vmem:[#allocation3] sm:$0xff] %vm724, %v723
        %v726 = vld [vmem:[%s457] sm:$0xf]
        %v727 = vld [vmem:[%s457 + $0x4] sm:$0xf]
        %v728 = vld [vmem:[%s457 + $0x8] sm:$0xf]
        %v729 = vld [vmem:[%s457 + $0xc] sm:$0xf]
        %v730 = vld [vmem:[%s457 + $0x10] sm:$0xf]
        %v731 = vld [vmem:[%s457 + $0x14] sm:$0xf]
        %v732 = vld [vmem:[%s457 + $0x18] sm:$0xf]
        %v733 = vld [vmem:[%s457 + $0x1c] sm:$0xf]
        %v734 = vunpack.c.l.bf16 %v726
        %v735 = vunpack.c.l.bf16 %v727
        %v736 = vunpack.c.l.bf16 %v728
        %v737 = vunpack.c.l.bf16 %v729
        %v738 = vunpack.c.l.bf16 %v730
        %v739 = vunpack.c.l.bf16 %v731
        %v740 = vunpack.c.l.bf16 %v732
        %v741 = vunpack.c.l.bf16 %v733
        %v742 = vperm.slane %v717, 0
        %v743 = vlaneseq
        %v744 = vshrl.u32 %v743, 7
        %746 = vset.pattern.permute.xlu0 %v744
        %747 = vperm.xlu0 %746, %v742
        %v748 = vpop.permute.xlu0 %747
        %v749 = vperm.slane %v717, 1
        %v750 = vlaneseq
        %v751 = vshrl.u32 %v750, 7
        %753 = vset.pattern.permute.xlu0 %v751
        %754 = vperm.xlu0 %753, %v749
        %v755 = vpop.permute.xlu0 %754
        %v756 = vperm.slane %v717, 2
        %v757 = vlaneseq
        %v758 = vshrl.u32 %v757, 7
        %760 = vset.pattern.permute.xlu0 %v758
        %761 = vperm.xlu0 %760, %v756
        %v762 = vpop.permute.xlu0 %761
        %v763 = vperm.slane %v717, 3
        %v764 = vlaneseq
        %v765 = vshrl.u32 %v764, 7
        %767 = vset.pattern.permute.xlu0 %v765
        %768 = vperm.xlu0 %767, %v763
        %v769 = vpop.permute.xlu0 %768
        %v770 = vperm.slane %v717, 4
        %v771 = vlaneseq
        %v772 = vshrl.u32 %v771, 7
        %774 = vset.pattern.permute.xlu0 %v772
        %775 = vperm.xlu0 %774, %v770
        %v776 = vpop.permute.xlu0 %775
        %v777 = vperm.slane %v717, 5
        %v778 = vlaneseq
        %v779 = vshrl.u32 %v778, 7
        %781 = vset.pattern.permute.xlu0 %v779
        %782 = vperm.xlu0 %781, %v777
        %v783 = vpop.permute.xlu0 %782
        %v784 = vperm.slane %v717, 6
        %v785 = vlaneseq
        %v786 = vshrl.u32 %v785, 7
        %788 = vset.pattern.permute.xlu0 %v786
        %789 = vperm.xlu0 %788, %v784
        %v790 = vpop.permute.xlu0 %789
        %v791 = vperm.slane %v717, 7
        %v792 = vlaneseq
        %v793 = vshrl.u32 %v792, 7
        %795 = vset.pattern.permute.xlu0 %v793
        %796 = vperm.xlu0 %795, %v791
        %v797 = vpop.permute.xlu0 %796
        %v798 = vmul.f32 %v748, %v734
        %v799 = vmul.f32 %v755, %v735
        %v800 = vmul.f32 %v762, %v736
        %v801 = vmul.f32 %v769, %v737
        %v802 = vmul.f32 %v776, %v738
        %v803 = vmul.f32 %v783, %v739
        %v804 = vmul.f32 %v790, %v740
        %v805 = vmul.f32 %v797, %v741
        %v806 = vsel %vm618, %v798, 0.0
        %v807 = vrot.slane %v806, 4
        %v808 = vadd.f32 %v806, %v807
        %v809 = vrot.slane %v808, 2
        %v810 = vadd.f32 %v808, %v809
        %v811 = vrot.slane %v810, 1
        %v812 = vadd.f32 %v810, %v811
        %v813 = vsel %vm618, %v799, 0.0
        %v814 = vrot.slane %v813, 4
        %v815 = vadd.f32 %v813, %v814
        %v816 = vrot.slane %v815, 2
        %v817 = vadd.f32 %v815, %v816
        %v818 = vrot.slane %v817, 1
        %v819 = vadd.f32 %v817, %v818
        %v820 = vsel %vm618, %v800, 0.0
        %v821 = vrot.slane %v820, 4
        %v822 = vadd.f32 %v820, %v821
        %v823 = vrot.slane %v822, 2
        %v824 = vadd.f32 %v822, %v823
        %v825 = vrot.slane %v824, 1
        %v826 = vadd.f32 %v824, %v825
        %v827 = vsel %vm618, %v801, 0.0
        %v828 = vrot.slane %v827, 4
        %v829 = vadd.f32 %v827, %v828
        %v830 = vrot.slane %v829, 2
        %v831 = vadd.f32 %v829, %v830
        %v832 = vrot.slane %v831, 1
        %v833 = vadd.f32 %v831, %v832
        %v834 = vsel %vm618, %v802, 0.0
        %v835 = vrot.slane %v834, 4
        %v836 = vadd.f32 %v834, %v835
        %v837 = vrot.slane %v836, 2
        %v838 = vadd.f32 %v836, %v837
        %v839 = vrot.slane %v838, 1
        %v840 = vadd.f32 %v838, %v839
        %v841 = vsel %vm618, %v803, 0.0
        %v842 = vrot.slane %v841, 4
        %v843 = vadd.f32 %v841, %v842
        %v844 = vrot.slane %v843, 2
        %v845 = vadd.f32 %v843, %v844
        %v846 = vrot.slane %v845, 1
        %v847 = vadd.f32 %v845, %v846
        %v848 = vsel %vm618, %v804, 0.0
        %v849 = vrot.slane %v848, 4
        %v850 = vadd.f32 %v848, %v849
        %v851 = vrot.slane %v850, 2
        %v852 = vadd.f32 %v850, %v851
        %v853 = vrot.slane %v852, 1
        %v854 = vadd.f32 %v852, %v853
        %v855 = vsel %vm618, %v805, 0.0
        %v856 = vrot.slane %v855, 4
        %v857 = vadd.f32 %v855, %v856
        %v858 = vrot.slane %v857, 2
        %v859 = vadd.f32 %v857, %v858
        %v860 = vrot.slane %v859, 1
        %v861 = vadd.f32 %v859, %v860
        %v870 = vsel %vm661, %v819, %v812
        %v871 = vsel %vm663, %v826, %v870
        %v872 = vsel %vm665, %v833, %v871
        %v873 = vsel %vm667, %v840, %v872
        %v874 = vsel %vm669, %v847, %v873
        %v875 = vsel %vm671, %v854, %v874
        %v876 = vsel %vm673, %v861, %v875
        %v879 = vsel %vm618, %v717, 0
        %881 = vmatpush.msra.mxu0 0.0
        %882 = vmatpush.msra.mxu0 0.0
        %883 = vmatpush.msra.mxu0 0.0
        %884 = vmatpush.msra.mxu0 0.0
        %885 = vmatpush.msra.mxu0 0.0
        %886 = vmatpush.msra.mxu0 0.0
        %887 = vmatpush.msra.mxu0 0.0
        %888 = vmatpush.msra.mxu0 0.0
        %889 = vmatpush.msra.mxu0 0.0
        %890 = vmatpush.msra.mxu0 0.0
        %891 = vmatpush.msra.mxu0 0.0
        %892 = vmatpush.msra.mxu0 0.0
        %893 = vmatpush.msra.mxu0 0.0
        %894 = vmatpush.msra.mxu0 0.0
        %895 = vmatpush.msra.mxu0 0.0
        %896 = vmatpush.msra.mxu0 %v569
        %897 = vmatmul.f32.gmra.mxu0 %v879
        %v898 = vpop.f32.mrf.mxu0
        %v899 = vadd.f32 %v876, %v898
        %900 = vdwg.mxu0
        %v901 = vld [vmem:[#allocation4] sm:$0xff]
        %903 = vset.pattern.permute.xlu0 0
        %904 = vperm.xlu0 %903, %v709
        %v905 = vpop.permute.xlu0 %904
        %v907 = vmul.f32 %v905, %v901
        %v908 = vadd.f32 %v907, %v899
        %909 = vst.msk [vmem:[#allocation4] sm:$0xff] %vm618, %v908
        %910 = vst.msk [vmem:[#allocation2] sm:$0xff] %vm724, %v706
        %v911 = vld [vmem:[%s529] sm:$0xff]
        %v912 = vld [vmem:[%s427] sm:$0xff]
        %v913 = vld [vmem:[%s437] sm:$0xff]
        %v914 = vld [vmem:[%s447] sm:$0xf]
        %v915 = vld [vmem:[%s447 + $0x4] sm:$0xf]
        %v916 = vld [vmem:[%s447 + $0x8] sm:$0xf]
        %v917 = vld [vmem:[%s447 + $0xc] sm:$0xf]
        %v918 = vld [vmem:[%s447 + $0x10] sm:$0xf]
        %v919 = vld [vmem:[%s447 + $0x14] sm:$0xf]
        %v920 = vld [vmem:[%s447 + $0x18] sm:$0xf]
        %v921 = vld [vmem:[%s447 + $0x1c] sm:$0xf]
        %v922 = vunpack.c.l.bf16 %v914
        %v923 = vunpack.c.l.bf16 %v915
        %v924 = vunpack.c.l.bf16 %v916
        %v925 = vunpack.c.l.bf16 %v917
        %v926 = vunpack.c.l.bf16 %v918
        %v927 = vunpack.c.l.bf16 %v919
        %v928 = vunpack.c.l.bf16 %v920
        %v929 = vunpack.c.l.bf16 %v921
        %v931 = vrot.slane %v911, 1
        %v932 = vrot.slane %v911, 2
        %v933 = vrot.slane %v911, 3
        %v934 = vrot.slane %v911, 4
        %v935 = vrot.slane %v911, 5
        %v936 = vrot.slane %v911, 6
        %v937 = vrot.slane %v911, 7
        %v938 = vperm.slane %v911, 0
        %v939 = vperm.slane %v931, 0
        %v940 = vperm.slane %v932, 0
        %v941 = vperm.slane %v933, 0
        %v942 = vperm.slane %v934, 0
        %v943 = vperm.slane %v935, 0
        %v944 = vperm.slane %v936, 0
        %v945 = vperm.slane %v937, 0
        %v954 = vmul.f32 %v922, %v938
        %v955 = vmul.f32 %v923, %v939
        %v956 = vmul.f32 %v924, %v940
        %v957 = vmul.f32 %v925, %v941
        %v958 = vmul.f32 %v926, %v942
        %v959 = vmul.f32 %v927, %v943
        %v960 = vmul.f32 %v928, %v944
        %v961 = vmul.f32 %v929, %v945
        %970 = vrot.lane.b32.xlu0 %v954, 120
        %v971 = vpop.permute.xlu0 %970
        %972 = vrot.lane.b32.xlu0 %v955, 120
        %v973 = vpop.permute.xlu0 %972
        %974 = vrot.lane.b32.xlu0 %v956, 120
        %v975 = vpop.permute.xlu0 %974
        %976 = vrot.lane.b32.xlu0 %v957, 120
        %v977 = vpop.permute.xlu0 %976
        %978 = vrot.lane.b32.xlu0 %v958, 120
        %v979 = vpop.permute.xlu0 %978
        %980 = vrot.lane.b32.xlu0 %v959, 120
        %v981 = vpop.permute.xlu0 %980
        %982 = vrot.lane.b32.xlu0 %v960, 120
        %v983 = vpop.permute.xlu0 %982
        %984 = vrot.lane.b32.xlu0 %v961, 120
        %v985 = vpop.permute.xlu0 %984
        %v994 = vsel %vm618, %v971, 0.0
        %995 = vadd.xlane.f32.xlu0 %v994
        %v996 = vpop.xlane.xlu0 %995
        %v997 = vsel %vm618, %v973, 0.0
        %998 = vadd.xlane.f32.xlu0 %v997
        %v999 = vpop.xlane.xlu0 %998
        %v1000 = vsel %vm618, %v975, 0.0
        %1001 = vadd.xlane.f32.xlu0 %v1000
        %v1002 = vpop.xlane.xlu0 %1001
        %v1003 = vsel %vm618, %v977, 0.0
        %1004 = vadd.xlane.f32.xlu0 %v1003
        %v1005 = vpop.xlane.xlu0 %1004
        %v1006 = vsel %vm618, %v979, 0.0
        %1007 = vadd.xlane.f32.xlu0 %v1006
        %v1008 = vpop.xlane.xlu0 %1007
        %v1009 = vsel %vm618, %v981, 0.0
        %1010 = vadd.xlane.f32.xlu0 %v1009
        %v1011 = vpop.xlane.xlu0 %1010
        %v1012 = vsel %vm618, %v983, 0.0
        %1013 = vadd.xlane.f32.xlu0 %v1012
        %v1014 = vpop.xlane.xlu0 %1013
        %v1015 = vsel %vm618, %v985, 0.0
        %1016 = vadd.xlane.f32.xlu0 %v1015
        %v1017 = vpop.xlane.xlu0 %1016
        %1018 = vrot.lane.b32.xlu0 %v911, 120
        %v1019 = vpop.permute.xlu0 %1018
        %1021 = vrot.lane.b32.xlu0 %v912, 120
        %v1022 = vpop.permute.xlu0 %1021
        %v1031 = vperm.slane %v996, %v652
        %v1032 = vperm.slane %v999, %v652
        %v1033 = vperm.slane %v1002, %v652
        %v1034 = vperm.slane %v1005, %v652
        %v1035 = vperm.slane %v1008, %v652
        %v1036 = vperm.slane %v1011, %v652
        %v1037 = vperm.slane %v1014, %v652
        %v1038 = vperm.slane %v1017, %v652
        %v1039 = vsel %vm661, %v1032, %v1031
        %v1040 = vsel %vm663, %v1033, %v1039
        %v1041 = vsel %vm665, %v1034, %v1040
        %v1042 = vsel %vm667, %v1035, %v1041
        %v1043 = vsel %vm669, %v1036, %v1042
        %v1044 = vsel %vm671, %v1037, %v1043
        %v1045 = vsel %vm673, %v1038, %v1044
        %v1047 = vsel %vm618, %v1019, 0
        %v1049 = vsel %vm618, %v1022, 0
        %1051 = vmatpush.xpose.msra.mxu0 0.0
        %1052 = vmatpush.xpose.msra.mxu0 0.0
        %1053 = vmatpush.xpose.msra.mxu0 0.0
        %1054 = vmatpush.xpose.msra.mxu0 0.0
        %1055 = vmatpush.xpose.msra.mxu0 0.0
        %1056 = vmatpush.xpose.msra.mxu0 0.0
        %1057 = vmatpush.xpose.msra.mxu0 0.0
        %1058 = vmatpush.xpose.msra.mxu0 0.0
        %1059 = vmatpush.xpose.msra.mxu0 0.0
        %1060 = vmatpush.xpose.msra.mxu0 0.0
        %1061 = vmatpush.xpose.msra.mxu0 0.0
        %1062 = vmatpush.xpose.msra.mxu0 0.0
        %1063 = vmatpush.xpose.msra.mxu0 0.0
        %1064 = vmatpush.xpose.msra.mxu0 0.0
        %1065 = vmatpush.xpose.msra.mxu0 0.0
        %1066 = vmatpush.xpose.msra.mxu0 %v1049
        %1067 = vmatmul.f32.gmra.mxu0 %v1047
        %v1068 = vpop.f32.mrf.mxu0
        %v1069 = vadd.f32 %v1045, %v1068
        %1070 = vdwg.mxu0
        %v1071 = vsel %vm566, -4.2949673e+09, %v1069
        %s1072 = scalar_lea.vmem [#allocation2], 8
        %v1073 = vld [vmem:[%s1072] sm:$0xff]
        %v1074 = vsel %vm618, %v1071, -inf
        %1075 = vmax.xlane.f32.xlu0 %v1074
        %v1076 = vpop.xlane.xlu0 %1075
        %v1077 = vmax.f32 %v1073, %v1076
        %v1078 = vsub.f32 %v1073, %v1077
        %v1079 = vmul.f32 %v1078, 1.442695
        %v1080 = vpow.pop %v1079
        %1082 = vset.pattern.permute.xlu0 0
        %1083 = vperm.xlu0 %1082, %v1077
        %v1084 = vpop.permute.xlu0 %1083
        %v1086 = vsub.f32 %v1071, %v1084
        %v1087 = vmul.f32 %v1086, 1.442695
        %v1088 = vpow.pop %v1087
        %s1089 = scalar_lea.vmem [#allocation3], 8
        %v1090 = vld [vmem:[%s1089] sm:$0xff]
        %v1091 = vmul.f32 %v1080, %v1090
        %v1092 = vsel %vm618, %v1088, 0.0
        %1093 = vadd.xlane.f32.xlu0 %v1092
        %v1094 = vpop.xlane.xlu0 %1093
        %v1095 = vadd.f32 %v1091, %v1094
        %1096 = vst.msk [vmem:[%s1089] sm:$0xff] %vm724, %v1095
        %v1097 = vld [vmem:[%s457] sm:$0xf]
        %v1098 = vld [vmem:[%s457 + $0x4] sm:$0xf]
        %v1099 = vld [vmem:[%s457 + $0x8] sm:$0xf]
        %v1100 = vld [vmem:[%s457 + $0xc] sm:$0xf]
        %v1101 = vld [vmem:[%s457 + $0x10] sm:$0xf]
        %v1102 = vld [vmem:[%s457 + $0x14] sm:$0xf]
        %v1103 = vld [vmem:[%s457 + $0x18] sm:$0xf]
        %v1104 = vld [vmem:[%s457 + $0x1c] sm:$0xf]
        %v1105 = vunpack.c.l.bf16 %v1097
        %v1106 = vunpack.c.l.bf16 %v1098
        %v1107 = vunpack.c.l.bf16 %v1099
        %v1108 = vunpack.c.l.bf16 %v1100
        %v1109 = vunpack.c.l.bf16 %v1101
        %v1110 = vunpack.c.l.bf16 %v1102
        %v1111 = vunpack.c.l.bf16 %v1103
        %v1112 = vunpack.c.l.bf16 %v1104
        %v1113 = vperm.slane %v1088, 0
        %v1114 = vlaneseq
        %v1115 = vshrl.u32 %v1114, 7
        %1117 = vset.pattern.permute.xlu0 %v1115
        %1118 = vperm.xlu0 %1117, %v1113
        %v1119 = vpop.permute.xlu0 %1118
        %v1120 = vperm.slane %v1088, 1
        %v1121 = vlaneseq
        %v1122 = vshrl.u32 %v1121, 7
        %1124 = vset.pattern.permute.xlu0 %v1122
        %1125 = vperm.xlu0 %1124, %v1120
        %v1126 = vpop.permute.xlu0 %1125
        %v1127 = vperm.slane %v1088, 2
        %v1128 = vlaneseq
        %v1129 = vshrl.u32 %v1128, 7
        %1131 = vset.pattern.permute.xlu0 %v1129
        %1132 = vperm.xlu0 %1131, %v1127
        %v1133 = vpop.permute.xlu0 %1132
        %v1134 = vperm.slane %v1088, 3
        %v1135 = vlaneseq
        %v1136 = vshrl.u32 %v1135, 7
        %1138 = vset.pattern.permute.xlu0 %v1136
        %1139 = vperm.xlu0 %1138, %v1134
        %v1140 = vpop.permute.xlu0 %1139
        %v1141 = vperm.slane %v1088, 4
        %v1142 = vlaneseq
        %v1143 = vshrl.u32 %v1142, 7
        %1145 = vset.pattern.permute.xlu0 %v1143
        %1146 = vperm.xlu0 %1145, %v1141
        %v1147 = vpop.permute.xlu0 %1146
        %v1148 = vperm.slane %v1088, 5
        %v1149 = vlaneseq
        %v1150 = vshrl.u32 %v1149, 7
        %1152 = vset.pattern.permute.xlu0 %v1150
        %1153 = vperm.xlu0 %1152, %v1148
        %v1154 = vpop.permute.xlu0 %1153
        %v1155 = vperm.slane %v1088, 6
        %v1156 = vlaneseq
        %v1157 = vshrl.u32 %v1156, 7
        %1159 = vset.pattern.permute.xlu0 %v1157
        %1160 = vperm.xlu0 %1159, %v1155
        %v1161 = vpop.permute.xlu0 %1160
        %v1162 = vperm.slane %v1088, 7
        %v1163 = vlaneseq
        %v1164 = vshrl.u32 %v1163, 7
        %1166 = vset.pattern.permute.xlu0 %v1164
        %1167 = vperm.xlu0 %1166, %v1162
        %v1168 = vpop.permute.xlu0 %1167
        %v1169 = vmul.f32 %v1119, %v1105
        %v1170 = vmul.f32 %v1126, %v1106
        %v1171 = vmul.f32 %v1133, %v1107
        %v1172 = vmul.f32 %v1140, %v1108
        %v1173 = vmul.f32 %v1147, %v1109
        %v1174 = vmul.f32 %v1154, %v1110
        %v1175 = vmul.f32 %v1161, %v1111
        %v1176 = vmul.f32 %v1168, %v1112
        %vm1177 = vcmask 130112
        %v1178 = vsel %vm1177, %v1169, 0.0
        %v1179 = vrot.slane %v1178, 4
        %v1180 = vadd.f32 %v1178, %v1179
        %v1181 = vrot.slane %v1180, 2
        %v1182 = vadd.f32 %v1180, %v1181
        %v1183 = vrot.slane %v1182, 1
        %v1184 = vadd.f32 %v1182, %v1183
        %v1185 = vsel %vm1177, %v1170, 0.0
        %v1186 = vrot.slane %v1185, 4
        %v1187 = vadd.f32 %v1185, %v1186
        %v1188 = vrot.slane %v1187, 2
        %v1189 = vadd.f32 %v1187, %v1188
        %v1190 = vrot.slane %v1189, 1
        %v1191 = vadd.f32 %v1189, %v1190
        %v1192 = vsel %vm1177, %v1171, 0.0
        %v1193 = vrot.slane %v1192, 4
        %v1194 = vadd.f32 %v1192, %v1193
        %v1195 = vrot.slane %v1194, 2
        %v1196 = vadd.f32 %v1194, %v1195
        %v1197 = vrot.slane %v1196, 1
        %v1198 = vadd.f32 %v1196, %v1197
        %v1199 = vsel %vm1177, %v1172, 0.0
        %v1200 = vrot.slane %v1199, 4
        %v1201 = vadd.f32 %v1199, %v1200
        %v1202 = vrot.slane %v1201, 2
        %v1203 = vadd.f32 %v1201, %v1202
        %v1204 = vrot.slane %v1203, 1
        %v1205 = vadd.f32 %v1203, %v1204
        %v1206 = vsel %vm1177, %v1173, 0.0
        %v1207 = vrot.slane %v1206, 4
        %v1208 = vadd.f32 %v1206, %v1207
        %v1209 = vrot.slane %v1208, 2
        %v1210 = vadd.f32 %v1208, %v1209
        %v1211 = vrot.slane %v1210, 1
        %v1212 = vadd.f32 %v1210, %v1211
        %v1213 = vsel %vm1177, %v1174, 0.0
        %v1214 = vrot.slane %v1213, 4
        %v1215 = vadd.f32 %v1213, %v1214
        %v1216 = vrot.slane %v1215, 2
        %v1217 = vadd.f32 %v1215, %v1216
        %v1218 = vrot.slane %v1217, 1
        %v1219 = vadd.f32 %v1217, %v1218
        %v1220 = vsel %vm1177, %v1175, 0.0
        %v1221 = vrot.slane %v1220, 4
        %v1222 = vadd.f32 %v1220, %v1221
        %v1223 = vrot.slane %v1222, 2
        %v1224 = vadd.f32 %v1222, %v1223
        %v1225 = vrot.slane %v1224, 1
        %v1226 = vadd.f32 %v1224, %v1225
        %v1227 = vsel %vm1177, %v1176, 0.0
        %v1228 = vrot.slane %v1227, 4
        %v1229 = vadd.f32 %v1227, %v1228
        %v1230 = vrot.slane %v1229, 2
        %v1231 = vadd.f32 %v1229, %v1230
        %v1232 = vrot.slane %v1231, 1
        %v1233 = vadd.f32 %v1231, %v1232
        %1235 = vrot.lane.b32.xlu0 %v913, 120
        %v1236 = vpop.permute.xlu0 %1235
        %v1246 = vsel %vm661, %v1191, %v1184
        %v1247 = vsel %vm663, %v1198, %v1246
        %v1248 = vsel %vm665, %v1205, %v1247
        %v1249 = vsel %vm667, %v1212, %v1248
        %v1250 = vsel %vm669, %v1219, %v1249
        %v1251 = vsel %vm671, %v1226, %v1250
        %v1252 = vsel %vm673, %v1233, %v1251
        %1253 = vrot.lane.b32.xlu0 %v1252, 120
        %v1254 = vpop.permute.xlu0 %1253
        %v1257 = vsel %vm618, %v1088, 0
        %1259 = vmatpush.msra.mxu0 0.0
        %1260 = vmatpush.msra.mxu0 0.0
        %1261 = vmatpush.msra.mxu0 0.0
        %1262 = vmatpush.msra.mxu0 0.0
        %1263 = vmatpush.msra.mxu0 0.0
        %1264 = vmatpush.msra.mxu0 0.0
        %1265 = vmatpush.msra.mxu0 0.0
        %1266 = vmatpush.msra.mxu0 0.0
        %1267 = vmatpush.msra.mxu0 0.0
        %1268 = vmatpush.msra.mxu0 0.0
        %1269 = vmatpush.msra.mxu0 0.0
        %1270 = vmatpush.msra.mxu0 0.0
        %1271 = vmatpush.msra.mxu0 0.0
        %1272 = vmatpush.msra.mxu0 0.0
        %1273 = vmatpush.msra.mxu0 0.0
        %1274 = vmatpush.msra.mxu0 %v1236
        %1275 = vmatmul.f32.gmra.mxu0 %v1257
        %v1276 = vpop.f32.mrf.mxu0
        %v1277 = vadd.f32 %v1254, %v1276
        %1278 = vdwg.mxu0
        %s1279 = scalar_lea.vmem [#allocation4], 8
        %v1280 = vld [vmem:[%s1279] sm:$0xff]
        %1282 = vset.pattern.permute.xlu0 0
        %1283 = vperm.xlu0 %1282, %v1080
        %v1284 = vpop.permute.xlu0 %1283
        %v1286 = vmul.f32 %v1284, %v1280
        %v1287 = vadd.f32 %v1286, %v1277
        %1288 = vst.msk [vmem:[%s1279] sm:$0xff] %vm618, %v1287
        %1289 = vst.msk [vmem:[%s1072] sm:$0xff] %vm724, %v1077
        %v1290 = vld [vmem:[%s529] sm:$0xff]
        %v1291 = vld [vmem:[%s427] sm:$0xff]
        %v1292 = vld [vmem:[%s437] sm:$0xff]
        %v1293 = vld [vmem:[%s447] sm:$0xf]
        %v1294 = vld [vmem:[%s447 + $0x4] sm:$0xf]
        %v1295 = vld [vmem:[%s447 + $0x8] sm:$0xf]
        %v1296 = vld [vmem:[%s447 + $0xc] sm:$0xf]
        %v1297 = vld [vmem:[%s447 + $0x10] sm:$0xf]
        %v1298 = vld [vmem:[%s447 + $0x14] sm:$0xf]
        %v1299 = vld [vmem:[%s447 + $0x18] sm:$0xf]
        %v1300 = vld [vmem:[%s447 + $0x1c] sm:$0xf]
        %v1301 = vunpack.c.l.bf16 %v1293
        %v1302 = vunpack.c.l.bf16 %v1294
        %v1303 = vunpack.c.l.bf16 %v1295
        %v1304 = vunpack.c.l.bf16 %v1296
        %v1305 = vunpack.c.l.bf16 %v1297
        %v1306 = vunpack.c.l.bf16 %v1298
        %v1307 = vunpack.c.l.bf16 %v1299
        %v1308 = vunpack.c.l.bf16 %v1300
        %v1310 = vrot.slane %v1290, 1
        %v1311 = vrot.slane %v1290, 2
        %v1312 = vrot.slane %v1290, 3
        %v1313 = vrot.slane %v1290, 4
        %v1314 = vrot.slane %v1290, 5
        %v1315 = vrot.slane %v1290, 6
        %v1316 = vrot.slane %v1290, 7
        %v1317 = vperm.slane %v1290, 0
        %v1318 = vperm.slane %v1310, 0
        %v1319 = vperm.slane %v1311, 0
        %v1320 = vperm.slane %v1312, 0
        %v1321 = vperm.slane %v1313, 0
        %v1322 = vperm.slane %v1314, 0
        %v1323 = vperm.slane %v1315, 0
        %v1324 = vperm.slane %v1316, 0
        %v1333 = vmul.f32 %v1301, %v1317
        %v1334 = vmul.f32 %v1302, %v1318
        %v1335 = vmul.f32 %v1303, %v1319
        %v1336 = vmul.f32 %v1304, %v1320
        %v1337 = vmul.f32 %v1305, %v1321
        %v1338 = vmul.f32 %v1306, %v1322
        %v1339 = vmul.f32 %v1307, %v1323
        %v1340 = vmul.f32 %v1308, %v1324
        %1349 = vrot.lane.b32.xlu0 %v1333, 112
        %v1350 = vpop.permute.xlu0 %1349
        %1351 = vrot.lane.b32.xlu0 %v1334, 112
        %v1352 = vpop.permute.xlu0 %1351
        %1353 = vrot.lane.b32.xlu0 %v1335, 112
        %v1354 = vpop.permute.xlu0 %1353
        %1355 = vrot.lane.b32.xlu0 %v1336, 112
        %v1356 = vpop.permute.xlu0 %1355
        %1357 = vrot.lane.b32.xlu0 %v1337, 112
        %v1358 = vpop.permute.xlu0 %1357
        %1359 = vrot.lane.b32.xlu0 %v1338, 112
        %v1360 = vpop.permute.xlu0 %1359
        %1361 = vrot.lane.b32.xlu0 %v1339, 112
        %v1362 = vpop.permute.xlu0 %1361
        %1363 = vrot.lane.b32.xlu0 %v1340, 112
        %v1364 = vpop.permute.xlu0 %1363
        %v1373 = vsel %vm618, %v1350, 0.0
        %1374 = vadd.xlane.f32.xlu0 %v1373
        %v1375 = vpop.xlane.xlu0 %1374
        %v1376 = vsel %vm618, %v1352, 0.0
        %1377 = vadd.xlane.f32.xlu0 %v1376
        %v1378 = vpop.xlane.xlu0 %1377
        %v1379 = vsel %vm618, %v1354, 0.0
        %1380 = vadd.xlane.f32.xlu0 %v1379
        %v1381 = vpop.xlane.xlu0 %1380
        %v1382 = vsel %vm618, %v1356, 0.0
        %1383 = vadd.xlane.f32.xlu0 %v1382
        %v1384 = vpop.xlane.xlu0 %1383
        %v1385 = vsel %vm618, %v1358, 0.0
        %1386 = vadd.xlane.f32.xlu0 %v1385
        %v1387 = vpop.xlane.xlu0 %1386
        %v1388 = vsel %vm618, %v1360, 0.0
        %1389 = vadd.xlane.f32.xlu0 %v1388
        %v1390 = vpop.xlane.xlu0 %1389
        %v1391 = vsel %vm618, %v1362, 0.0
        %1392 = vadd.xlane.f32.xlu0 %v1391
        %v1393 = vpop.xlane.xlu0 %1392
        %v1394 = vsel %vm618, %v1364, 0.0
        %1395 = vadd.xlane.f32.xlu0 %v1394
        %v1396 = vpop.xlane.xlu0 %1395
        %1397 = vrot.lane.b32.xlu0 %v1290, 112
        %v1398 = vpop.permute.xlu0 %1397
        %1400 = vrot.lane.b32.xlu0 %v1291, 112
        %v1401 = vpop.permute.xlu0 %1400
        %v1410 = vperm.slane %v1375, %v652
        %v1411 = vperm.slane %v1378, %v652
        %v1412 = vperm.slane %v1381, %v652
        %v1413 = vperm.slane %v1384, %v652
        %v1414 = vperm.slane %v1387, %v652
        %v1415 = vperm.slane %v1390, %v652
        %v1416 = vperm.slane %v1393, %v652
        %v1417 = vperm.slane %v1396, %v652
        %v1418 = vsel %vm661, %v1411, %v1410
        %v1419 = vsel %vm663, %v1412, %v1418
        %v1420 = vsel %vm665, %v1413, %v1419
        %v1421 = vsel %vm667, %v1414, %v1420
        %v1422 = vsel %vm669, %v1415, %v1421
        %v1423 = vsel %vm671, %v1416, %v1422
        %v1424 = vsel %vm673, %v1417, %v1423
        %v1426 = vsel %vm618, %v1398, 0
        %v1428 = vsel %vm618, %v1401, 0
        %1430 = vmatpush.xpose.msra.mxu0 0.0
        %1431 = vmatpush.xpose.msra.mxu0 0.0
        %1432 = vmatpush.xpose.msra.mxu0 0.0
        %1433 = vmatpush.xpose.msra.mxu0 0.0
        %1434 = vmatpush.xpose.msra.mxu0 0.0
        %1435 = vmatpush.xpose.msra.mxu0 0.0
        %1436 = vmatpush.xpose.msra.mxu0 0.0
        %1437 = vmatpush.xpose.msra.mxu0 0.0
        %1438 = vmatpush.xpose.msra.mxu0 0.0
        %1439 = vmatpush.xpose.msra.mxu0 0.0
        %1440 = vmatpush.xpose.msra.mxu0 0.0
        %1441 = vmatpush.xpose.msra.mxu0 0.0
        %1442 = vmatpush.xpose.msra.mxu0 0.0
        %1443 = vmatpush.xpose.msra.mxu0 0.0
        %1444 = vmatpush.xpose.msra.mxu0 0.0
        %1445 = vmatpush.xpose.msra.mxu0 %v1428
        %1446 = vmatmul.f32.gmra.mxu0 %v1426
        %v1447 = vpop.f32.mrf.mxu0
        %v1448 = vadd.f32 %v1424, %v1447
        %1449 = vdwg.mxu0
        %v1450 = vsel %vm566, -4.2949673e+09, %v1448
        %s1451 = scalar_lea.vmem [#allocation2], 16
        %v1452 = vld [vmem:[%s1451] sm:$0xff]
        %v1453 = vsel %vm618, %v1450, -inf
        %1454 = vmax.xlane.f32.xlu0 %v1453
        %v1455 = vpop.xlane.xlu0 %1454
        %v1456 = vmax.f32 %v1452, %v1455
        %v1457 = vsub.f32 %v1452, %v1456
        %v1458 = vmul.f32 %v1457, 1.442695
        %v1459 = vpow.pop %v1458
        %1461 = vset.pattern.permute.xlu0 0
        %1462 = vperm.xlu0 %1461, %v1456
        %v1463 = vpop.permute.xlu0 %1462
        %v1465 = vsub.f32 %v1450, %v1463
        %v1466 = vmul.f32 %v1465, 1.442695
        %v1467 = vpow.pop %v1466
        %s1468 = scalar_lea.vmem [#allocation3], 16
        %v1469 = vld [vmem:[%s1468] sm:$0xff]
        %v1470 = vmul.f32 %v1459, %v1469
        %v1471 = vsel %vm618, %v1467, 0.0
        %1472 = vadd.xlane.f32.xlu0 %v1471
        %v1473 = vpop.xlane.xlu0 %1472
        %v1474 = vadd.f32 %v1470, %v1473
        %1475 = vst.msk [vmem:[%s1468] sm:$0xff] %vm724, %v1474
        %v1476 = vld [vmem:[%s457] sm:$0xf]
        %v1477 = vld [vmem:[%s457 + $0x4] sm:$0xf]
        %v1478 = vld [vmem:[%s457 + $0x8] sm:$0xf]
        %v1479 = vld [vmem:[%s457 + $0xc] sm:$0xf]
        %v1480 = vld [vmem:[%s457 + $0x10] sm:$0xf]
        %v1481 = vld [vmem:[%s457 + $0x14] sm:$0xf]
        %v1482 = vld [vmem:[%s457 + $0x18] sm:$0xf]
        %v1483 = vld [vmem:[%s457 + $0x1c] sm:$0xf]
        %v1484 = vunpack.c.l.bf16 %v1476
        %v1485 = vunpack.c.l.bf16 %v1477
        %v1486 = vunpack.c.l.bf16 %v1478
        %v1487 = vunpack.c.l.bf16 %v1479
        %v1488 = vunpack.c.l.bf16 %v1480
        %v1489 = vunpack.c.l.bf16 %v1481
        %v1490 = vunpack.c.l.bf16 %v1482
        %v1491 = vunpack.c.l.bf16 %v1483
        %v1492 = vperm.slane %v1467, 0
        %v1493 = vlaneseq
        %v1494 = vshrl.u32 %v1493, 7
        %1496 = vset.pattern.permute.xlu0 %v1494
        %1497 = vperm.xlu0 %1496, %v1492
        %v1498 = vpop.permute.xlu0 %1497
        %v1499 = vperm.slane %v1467, 1
        %v1500 = vlaneseq
        %v1501 = vshrl.u32 %v1500, 7
        %1503 = vset.pattern.permute.xlu0 %v1501
        %1504 = vperm.xlu0 %1503, %v1499
        %v1505 = vpop.permute.xlu0 %1504
        %v1506 = vperm.slane %v1467, 2
        %v1507 = vlaneseq
        %v1508 = vshrl.u32 %v1507, 7
        %1510 = vset.pattern.permute.xlu0 %v1508
        %1511 = vperm.xlu0 %1510, %v1506
        %v1512 = vpop.permute.xlu0 %1511
        %v1513 = vperm.slane %v1467, 3
        %v1514 = vlaneseq
        %v1515 = vshrl.u32 %v1514, 7
        %1517 = vset.pattern.permute.xlu0 %v1515
        %1518 = vperm.xlu0 %1517, %v1513
        %v1519 = vpop.permute.xlu0 %1518
        %v1520 = vperm.slane %v1467, 4
        %v1521 = vlaneseq
        %v1522 = vshrl.u32 %v1521, 7
        %1524 = vset.pattern.permute.xlu0 %v1522
        %1525 = vperm.xlu0 %1524, %v1520
        %v1526 = vpop.permute.xlu0 %1525
        %v1527 = vperm.slane %v1467, 5
        %v1528 = vlaneseq
        %v1529 = vshrl.u32 %v1528, 7
        %1531 = vset.pattern.permute.xlu0 %v1529
        %1532 = vperm.xlu0 %1531, %v1527
        %v1533 = vpop.permute.xlu0 %1532
        %v1534 = vperm.slane %v1467, 6
        %v1535 = vlaneseq
        %v1536 = vshrl.u32 %v1535, 7
        %1538 = vset.pattern.permute.xlu0 %v1536
        %1539 = vperm.xlu0 %1538, %v1534
        %v1540 = vpop.permute.xlu0 %1539
        %v1541 = vperm.slane %v1467, 7
        %v1542 = vlaneseq
        %v1543 = vshrl.u32 %v1542, 7
        %1545 = vset.pattern.permute.xlu0 %v1543
        %1546 = vperm.xlu0 %1545, %v1541
        %v1547 = vpop.permute.xlu0 %1546
        %v1548 = vmul.f32 %v1498, %v1484
        %v1549 = vmul.f32 %v1505, %v1485
        %v1550 = vmul.f32 %v1512, %v1486
        %v1551 = vmul.f32 %v1519, %v1487
        %v1552 = vmul.f32 %v1526, %v1488
        %v1553 = vmul.f32 %v1533, %v1489
        %v1554 = vmul.f32 %v1540, %v1490
        %v1555 = vmul.f32 %v1547, %v1491
        %vm1556 = vcmask 195712
        %v1557 = vsel %vm1556, %v1548, 0.0
        %v1558 = vrot.slane %v1557, 4
        %v1559 = vadd.f32 %v1557, %v1558
        %v1560 = vrot.slane %v1559, 2
        %v1561 = vadd.f32 %v1559, %v1560
        %v1562 = vrot.slane %v1561, 1
        %v1563 = vadd.f32 %v1561, %v1562
        %v1564 = vsel %vm1556, %v1549, 0.0
        %v1565 = vrot.slane %v1564, 4
        %v1566 = vadd.f32 %v1564, %v1565
        %v1567 = vrot.slane %v1566, 2
        %v1568 = vadd.f32 %v1566, %v1567
        %v1569 = vrot.slane %v1568, 1
        %v1570 = vadd.f32 %v1568, %v1569
        %v1571 = vsel %vm1556, %v1550, 0.0
        %v1572 = vrot.slane %v1571, 4
        %v1573 = vadd.f32 %v1571, %v1572
        %v1574 = vrot.slane %v1573, 2
        %v1575 = vadd.f32 %v1573, %v1574
        %v1576 = vrot.slane %v1575, 1
        %v1577 = vadd.f32 %v1575, %v1576
        %v1578 = vsel %vm1556, %v1551, 0.0
        %v1579 = vrot.slane %v1578, 4
        %v1580 = vadd.f32 %v1578, %v1579
        %v1581 = vrot.slane %v1580, 2
        %v1582 = vadd.f32 %v1580, %v1581
        %v1583 = vrot.slane %v1582, 1
        %v1584 = vadd.f32 %v1582, %v1583
        %v1585 = vsel %vm1556, %v1552, 0.0
        %v1586 = vrot.slane %v1585, 4
        %v1587 = vadd.f32 %v1585, %v1586
        %v1588 = vrot.slane %v1587, 2
        %v1589 = vadd.f32 %v1587, %v1588
        %v1590 = vrot.slane %v1589, 1
        %v1591 = vadd.f32 %v1589, %v1590
        %v1592 = vsel %vm1556, %v1553, 0.0
        %v1593 = vrot.slane %v1592, 4
        %v1594 = vadd.f32 %v1592, %v1593
        %v1595 = vrot.slane %v1594, 2
        %v1596 = vadd.f32 %v1594, %v1595
        %v1597 = vrot.slane %v1596, 1
        %v1598 = vadd.f32 %v1596, %v1597
        %v1599 = vsel %vm1556, %v1554, 0.0
        %v1600 = vrot.slane %v1599, 4
        %v1601 = vadd.f32 %v1599, %v1600
        %v1602 = vrot.slane %v1601, 2
        %v1603 = vadd.f32 %v1601, %v1602
        %v1604 = vrot.slane %v1603, 1
        %v1605 = vadd.f32 %v1603, %v1604
        %v1606 = vsel %vm1556, %v1555, 0.0
        %v1607 = vrot.slane %v1606, 4
        %v1608 = vadd.f32 %v1606, %v1607
        %v1609 = vrot.slane %v1608, 2
        %v1610 = vadd.f32 %v1608, %v1609
        %v1611 = vrot.slane %v1610, 1
        %v1612 = vadd.f32 %v1610, %v1611
        %1614 = vrot.lane.b32.xlu0 %v1292, 112
        %v1615 = vpop.permute.xlu0 %1614
        %v1625 = vsel %vm661, %v1570, %v1563
        %v1626 = vsel %vm663, %v1577, %v1625
        %v1627 = vsel %vm665, %v1584, %v1626
        %v1628 = vsel %vm667, %v1591, %v1627
        %v1629 = vsel %vm669, %v1598, %v1628
        %v1630 = vsel %vm671, %v1605, %v1629
        %v1631 = vsel %vm673, %v1612, %v1630
        %1632 = vrot.lane.b32.xlu0 %v1631, 112
        %v1633 = vpop.permute.xlu0 %1632
        %v1636 = vsel %vm618, %v1467, 0
        %1638 = vmatpush.msra.mxu0 0.0
        %1639 = vmatpush.msra.mxu0 0.0
        %1640 = vmatpush.msra.mxu0 0.0
        %1641 = vmatpush.msra.mxu0 0.0
        %1642 = vmatpush.msra.mxu0 0.0
        %1643 = vmatpush.msra.mxu0 0.0
        %1644 = vmatpush.msra.mxu0 0.0
        %1645 = vmatpush.msra.mxu0 0.0
        %1646 = vmatpush.msra.mxu0 0.0
        %1647 = vmatpush.msra.mxu0 0.0
        %1648 = vmatpush.msra.mxu0 0.0
        %1649 = vmatpush.msra.mxu0 0.0
        %1650 = vmatpush.msra.mxu0 0.0
        %1651 = vmatpush.msra.mxu0 0.0
        %1652 = vmatpush.msra.mxu0 0.0
        %1653 = vmatpush.msra.mxu0 %v1615
        %1654 = vmatmul.f32.gmra.mxu0 %v1636
        %v1655 = vpop.f32.mrf.mxu0
        %v1656 = vadd.f32 %v1633, %v1655
        %1657 = vdwg.mxu0
        %s1658 = scalar_lea.vmem [#allocation4], 16
        %v1659 = vld [vmem:[%s1658] sm:$0xff]
        %1661 = vset.pattern.permute.xlu0 0
        %1662 = vperm.xlu0 %1661, %v1459
        %v1663 = vpop.permute.xlu0 %1662
        %v1665 = vmul.f32 %v1663, %v1659
        %v1666 = vadd.f32 %v1665, %v1656
        %1667 = vst.msk [vmem:[%s1658] sm:$0xff] %vm618, %v1666
        %1668 = vst.msk [vmem:[%s1451] sm:$0xff] %vm724, %v1456
        %v1669 = vld [vmem:[%s529] sm:$0xff]
        %v1670 = vld [vmem:[%s427] sm:$0xff]
        %v1671 = vld [vmem:[%s437] sm:$0xff]
        %v1672 = vld [vmem:[%s447] sm:$0xf]
        %v1673 = vld [vmem:[%s447 + $0x4] sm:$0xf]
        %v1674 = vld [vmem:[%s447 + $0x8] sm:$0xf]
        %v1675 = vld [vmem:[%s447 + $0xc] sm:$0xf]
        %v1676 = vld [vmem:[%s447 + $0x10] sm:$0xf]
        %v1677 = vld [vmem:[%s447 + $0x14] sm:$0xf]
        %v1678 = vld [vmem:[%s447 + $0x18] sm:$0xf]
        %v1679 = vld [vmem:[%s447 + $0x1c] sm:$0xf]
        %v1680 = vunpack.c.l.bf16 %v1672
        %v1681 = vunpack.c.l.bf16 %v1673
        %v1682 = vunpack.c.l.bf16 %v1674
        %v1683 = vunpack.c.l.bf16 %v1675
        %v1684 = vunpack.c.l.bf16 %v1676
        %v1685 = vunpack.c.l.bf16 %v1677
        %v1686 = vunpack.c.l.bf16 %v1678
        %v1687 = vunpack.c.l.bf16 %v1679
        %v1689 = vrot.slane %v1669, 1
        %v1690 = vrot.slane %v1669, 2
        %v1691 = vrot.slane %v1669, 3
        %v1692 = vrot.slane %v1669, 4
        %v1693 = vrot.slane %v1669, 5
        %v1694 = vrot.slane %v1669, 6
        %v1695 = vrot.slane %v1669, 7
        %v1696 = vperm.slane %v1669, 0
        %v1697 = vperm.slane %v1689, 0
        %v1698 = vperm.slane %v1690, 0
        %v1699 = vperm.slane %v1691, 0
        %v1700 = vperm.slane %v1692, 0
        %v1701 = vperm.slane %v1693, 0
        %v1702 = vperm.slane %v1694, 0
        %v1703 = vperm.slane %v1695, 0
        %v1712 = vmul.f32 %v1680, %v1696
        %v1713 = vmul.f32 %v1681, %v1697
        %v1714 = vmul.f32 %v1682, %v1698
        %v1715 = vmul.f32 %v1683, %v1699
        %v1716 = vmul.f32 %v1684, %v1700
        %v1717 = vmul.f32 %v1685, %v1701
        %v1718 = vmul.f32 %v1686, %v1702
        %v1719 = vmul.f32 %v1687, %v1703
        %1728 = vrot.lane.b32.xlu0 %v1712, 104
        %v1729 = vpop.permute.xlu0 %1728
        %1730 = vrot.lane.b32.xlu0 %v1713, 104
        %v1731 = vpop.permute.xlu0 %1730
        %1732 = vrot.lane.b32.xlu0 %v1714, 104
        %v1733 = vpop.permute.xlu0 %1732
        %1734 = vrot.lane.b32.xlu0 %v1715, 104
        %v1735 = vpop.permute.xlu0 %1734
        %1736 = vrot.lane.b32.xlu0 %v1716, 104
        %v1737 = vpop.permute.xlu0 %1736
        %1738 = vrot.lane.b32.xlu0 %v1717, 104
        %v1739 = vpop.permute.xlu0 %1738
        %1740 = vrot.lane.b32.xlu0 %v1718, 104
        %v1741 = vpop.permute.xlu0 %1740
        %1742 = vrot.lane.b32.xlu0 %v1719, 104
        %v1743 = vpop.permute.xlu0 %1742
        %v1752 = vsel %vm618, %v1729, 0.0
        %1753 = vadd.xlane.f32.xlu0 %v1752
        %v1754 = vpop.xlane.xlu0 %1753
        %v1755 = vsel %vm618, %v1731, 0.0
        %1756 = vadd.xlane.f32.xlu0 %v1755
        %v1757 = vpop.xlane.xlu0 %1756
        %v1758 = vsel %vm618, %v1733, 0.0
        %1759 = vadd.xlane.f32.xlu0 %v1758
        %v1760 = vpop.xlane.xlu0 %1759
        %v1761 = vsel %vm618, %v1735, 0.0
        %1762 = vadd.xlane.f32.xlu0 %v1761
        %v1763 = vpop.xlane.xlu0 %1762
        %v1764 = vsel %vm618, %v1737, 0.0
        %1765 = vadd.xlane.f32.xlu0 %v1764
        %v1766 = vpop.xlane.xlu0 %1765
        %v1767 = vsel %vm618, %v1739, 0.0
        %1768 = vadd.xlane.f32.xlu0 %v1767
        %v1769 = vpop.xlane.xlu0 %1768
        %v1770 = vsel %vm618, %v1741, 0.0
        %1771 = vadd.xlane.f32.xlu0 %v1770
        %v1772 = vpop.xlane.xlu0 %1771
        %v1773 = vsel %vm618, %v1743, 0.0
        %1774 = vadd.xlane.f32.xlu0 %v1773
        %v1775 = vpop.xlane.xlu0 %1774
        %1776 = vrot.lane.b32.xlu0 %v1669, 104
        %v1777 = vpop.permute.xlu0 %1776
        %1779 = vrot.lane.b32.xlu0 %v1670, 104
        %v1780 = vpop.permute.xlu0 %1779
        %v1789 = vperm.slane %v1754, %v652
        %v1790 = vperm.slane %v1757, %v652
        %v1791 = vperm.slane %v1760, %v652
        %v1792 = vperm.slane %v1763, %v652
        %v1793 = vperm.slane %v1766, %v652
        %v1794 = vperm.slane %v1769, %v652
        %v1795 = vperm.slane %v1772, %v652
        %v1796 = vperm.slane %v1775, %v652
        %v1797 = vsel %vm661, %v1790, %v1789
        %v1798 = vsel %vm663, %v1791, %v1797
        %v1799 = vsel %vm665, %v1792, %v1798
        %v1800 = vsel %vm667, %v1793, %v1799
        %v1801 = vsel %vm669, %v1794, %v1800
        %v1802 = vsel %vm671, %v1795, %v1801
        %v1803 = vsel %vm673, %v1796, %v1802
        %v1805 = vsel %vm618, %v1777, 0
        %v1807 = vsel %vm618, %v1780, 0
        %1809 = vmatpush.xpose.msra.mxu0 0.0
        %1810 = vmatpush.xpose.msra.mxu0 0.0
        %1811 = vmatpush.xpose.msra.mxu0 0.0
        %1812 = vmatpush.xpose.msra.mxu0 0.0
        %1813 = vmatpush.xpose.msra.mxu0 0.0
        %1814 = vmatpush.xpose.msra.mxu0 0.0
        %1815 = vmatpush.xpose.msra.mxu0 0.0
        %1816 = vmatpush.xpose.msra.mxu0 0.0
        %1817 = vmatpush.xpose.msra.mxu0 0.0
        %1818 = vmatpush.xpose.msra.mxu0 0.0
        %1819 = vmatpush.xpose.msra.mxu0 0.0
        %1820 = vmatpush.xpose.msra.mxu0 0.0
        %1821 = vmatpush.xpose.msra.mxu0 0.0
        %1822 = vmatpush.xpose.msra.mxu0 0.0
        %1823 = vmatpush.xpose.msra.mxu0 0.0
        %1824 = vmatpush.xpose.msra.mxu0 %v1807
        %1825 = vmatmul.f32.gmra.mxu0 %v1805
        %v1826 = vpop.f32.mrf.mxu0
        %v1827 = vadd.f32 %v1803, %v1826
        %1828 = vdwg.mxu0
        %v1829 = vsel %vm566, -4.2949673e+09, %v1827
        %s1830 = scalar_lea.vmem [#allocation2], 24
        %v1831 = vld [vmem:[%s1830] sm:$0xff]
        %v1832 = vsel %vm618, %v1829, -inf
        %1833 = vmax.xlane.f32.xlu0 %v1832
        %v1834 = vpop.xlane.xlu0 %1833
        %v1835 = vmax.f32 %v1831, %v1834
        %v1836 = vsub.f32 %v1831, %v1835
        %v1837 = vmul.f32 %v1836, 1.442695
        %v1838 = vpow.pop %v1837
        %1840 = vset.pattern.permute.xlu0 0
        %1841 = vperm.xlu0 %1840, %v1835
        %v1842 = vpop.permute.xlu0 %1841
        %v1844 = vsub.f32 %v1829, %v1842
        %v1845 = vmul.f32 %v1844, 1.442695
        %v1846 = vpow.pop %v1845
        %s1847 = scalar_lea.vmem [#allocation3], 24
        %v1848 = vld [vmem:[%s1847] sm:$0xff]
        %v1849 = vmul.f32 %v1838, %v1848
        %v1850 = vsel %vm618, %v1846, 0.0
        %1851 = vadd.xlane.f32.xlu0 %v1850
        %v1852 = vpop.xlane.xlu0 %1851
        %v1853 = vadd.f32 %v1849, %v1852
        %1854 = vst.msk [vmem:[%s1847] sm:$0xff] %vm724, %v1853
        %v1855 = vld [vmem:[%s457] sm:$0xf]
        %v1856 = vld [vmem:[%s457 + $0x4] sm:$0xf]
        %v1857 = vld [vmem:[%s457 + $0x8] sm:$0xf]
        %v1858 = vld [vmem:[%s457 + $0xc] sm:$0xf]
        %v1859 = vld [vmem:[%s457 + $0x10] sm:$0xf]
        %v1860 = vld [vmem:[%s457 + $0x14] sm:$0xf]
        %v1861 = vld [vmem:[%s457 + $0x18] sm:$0xf]
        %v1862 = vld [vmem:[%s457 + $0x1c] sm:$0xf]
        %v1863 = vunpack.c.l.bf16 %v1855
        %v1864 = vunpack.c.l.bf16 %v1856
        %v1865 = vunpack.c.l.bf16 %v1857
        %v1866 = vunpack.c.l.bf16 %v1858
        %v1867 = vunpack.c.l.bf16 %v1859
        %v1868 = vunpack.c.l.bf16 %v1860
        %v1869 = vunpack.c.l.bf16 %v1861
        %v1870 = vunpack.c.l.bf16 %v1862
        %v1871 = vperm.slane %v1846, 0
        %v1872 = vlaneseq
        %v1873 = vshrl.u32 %v1872, 7
        %1875 = vset.pattern.permute.xlu0 %v1873
        %1876 = vperm.xlu0 %1875, %v1871
        %v1877 = vpop.permute.xlu0 %1876
        %v1878 = vperm.slane %v1846, 1
        %v1879 = vlaneseq
        %v1880 = vshrl.u32 %v1879, 7
        %1882 = vset.pattern.permute.xlu0 %v1880
        %1883 = vperm.xlu0 %1882, %v1878
        %v1884 = vpop.permute.xlu0 %1883
        %v1885 = vperm.slane %v1846, 2
        %v1886 = vlaneseq
        %v1887 = vshrl.u32 %v1886, 7
        %1889 = vset.pattern.permute.xlu0 %v1887
        %1890 = vperm.xlu0 %1889, %v1885
        %v1891 = vpop.permute.xlu0 %1890
        %v1892 = vperm.slane %v1846, 3
        %v1893 = vlaneseq
        %v1894 = vshrl.u32 %v1893, 7
        %1896 = vset.pattern.permute.xlu0 %v1894
        %1897 = vperm.xlu0 %1896, %v1892
        %v1898 = vpop.permute.xlu0 %1897
        %v1899 = vperm.slane %v1846, 4
        %v1900 = vlaneseq
        %v1901 = vshrl.u32 %v1900, 7
        %1903 = vset.pattern.permute.xlu0 %v1901
        %1904 = vperm.xlu0 %1903, %v1899
        %v1905 = vpop.permute.xlu0 %1904
        %v1906 = vperm.slane %v1846, 5
        %v1907 = vlaneseq
        %v1908 = vshrl.u32 %v1907, 7
        %1910 = vset.pattern.permute.xlu0 %v1908
        %1911 = vperm.xlu0 %1910, %v1906
        %v1912 = vpop.permute.xlu0 %1911
        %v1913 = vperm.slane %v1846, 6
        %v1914 = vlaneseq
        %v1915 = vshrl.u32 %v1914, 7
        %1917 = vset.pattern.permute.xlu0 %v1915
        %1918 = vperm.xlu0 %1917, %v1913
        %v1919 = vpop.permute.xlu0 %1918
        %v1920 = vperm.slane %v1846, 7
        %v1921 = vlaneseq
        %v1922 = vshrl.u32 %v1921, 7
        %1924 = vset.pattern.permute.xlu0 %v1922
        %1925 = vperm.xlu0 %1924, %v1920
        %v1926 = vpop.permute.xlu0 %1925
        %v1927 = vmul.f32 %v1877, %v1863
        %v1928 = vmul.f32 %v1884, %v1864
        %v1929 = vmul.f32 %v1891, %v1865
        %v1930 = vmul.f32 %v1898, %v1866
        %v1931 = vmul.f32 %v1905, %v1867
        %v1932 = vmul.f32 %v1912, %v1868
        %v1933 = vmul.f32 %v1919, %v1869
        %v1934 = vmul.f32 %v1926, %v1870
        %vm1935 = vcmask 261312
        %v1936 = vsel %vm1935, %v1927, 0.0
        %v1937 = vrot.slane %v1936, 4
        %v1938 = vadd.f32 %v1936, %v1937
        %v1939 = vrot.slane %v1938, 2
        %v1940 = vadd.f32 %v1938, %v1939
        %v1941 = vrot.slane %v1940, 1
        %v1942 = vadd.f32 %v1940, %v1941
        %v1943 = vsel %vm1935, %v1928, 0.0
        %v1944 = vrot.slane %v1943, 4
        %v1945 = vadd.f32 %v1943, %v1944
        %v1946 = vrot.slane %v1945, 2
        %v1947 = vadd.f32 %v1945, %v1946
        %v1948 = vrot.slane %v1947, 1
        %v1949 = vadd.f32 %v1947, %v1948
        %v1950 = vsel %vm1935, %v1929, 0.0
        %v1951 = vrot.slane %v1950, 4
        %v1952 = vadd.f32 %v1950, %v1951
        %v1953 = vrot.slane %v1952, 2
        %v1954 = vadd.f32 %v1952, %v1953
        %v1955 = vrot.slane %v1954, 1
        %v1956 = vadd.f32 %v1954, %v1955
        %v1957 = vsel %vm1935, %v1930, 0.0
        %v1958 = vrot.slane %v1957, 4
        %v1959 = vadd.f32 %v1957, %v1958
        %v1960 = vrot.slane %v1959, 2
        %v1961 = vadd.f32 %v1959, %v1960
        %v1962 = vrot.slane %v1961, 1
        %v1963 = vadd.f32 %v1961, %v1962
        %v1964 = vsel %vm1935, %v1931, 0.0
        %v1965 = vrot.slane %v1964, 4
        %v1966 = vadd.f32 %v1964, %v1965
        %v1967 = vrot.slane %v1966, 2
        %v1968 = vadd.f32 %v1966, %v1967
        %v1969 = vrot.slane %v1968, 1
        %v1970 = vadd.f32 %v1968, %v1969
        %v1971 = vsel %vm1935, %v1932, 0.0
        %v1972 = vrot.slane %v1971, 4
        %v1973 = vadd.f32 %v1971, %v1972
        %v1974 = vrot.slane %v1973, 2
        %v1975 = vadd.f32 %v1973, %v1974
        %v1976 = vrot.slane %v1975, 1
        %v1977 = vadd.f32 %v1975, %v1976
        %v1978 = vsel %vm1935, %v1933, 0.0
        %v1979 = vrot.slane %v1978, 4
        %v1980 = vadd.f32 %v1978, %v1979
        %v1981 = vrot.slane %v1980, 2
        %v1982 = vadd.f32 %v1980, %v1981
        %v1983 = vrot.slane %v1982, 1
        %v1984 = vadd.f32 %v1982, %v1983
        %v1985 = vsel %vm1935, %v1934, 0.0
        %v1986 = vrot.slane %v1985, 4
        %v1987 = vadd.f32 %v1985, %v1986
        %v1988 = vrot.slane %v1987, 2
        %v1989 = vadd.f32 %v1987, %v1988
        %v1990 = vrot.slane %v1989, 1
        %v1991 = vadd.f32 %v1989, %v1990
        %1993 = vrot.lane.b32.xlu0 %v1671, 104
        %v1994 = vpop.permute.xlu0 %1993
        %v2004 = vsel %vm661, %v1949, %v1942
        %v2005 = vsel %vm663, %v1956, %v2004
        %v2006 = vsel %vm665, %v1963, %v2005
        %v2007 = vsel %vm667, %v1970, %v2006
        %v2008 = vsel %vm669, %v1977, %v2007
        %v2009 = vsel %vm671, %v1984, %v2008
        %v2010 = vsel %vm673, %v1991, %v2009
        %2011 = vrot.lane.b32.xlu0 %v2010, 104
        %v2012 = vpop.permute.xlu0 %2011
        %v2015 = vsel %vm618, %v1846, 0
        %2017 = vmatpush.msra.mxu0 0.0
        %2018 = vmatpush.msra.mxu0 0.0
        %2019 = vmatpush.msra.mxu0 0.0
        %2020 = vmatpush.msra.mxu0 0.0
        %2021 = vmatpush.msra.mxu0 0.0
        %2022 = vmatpush.msra.mxu0 0.0
        %2023 = vmatpush.msra.mxu0 0.0
        %2024 = vmatpush.msra.mxu0 0.0
        %2025 = vmatpush.msra.mxu0 0.0
        %2026 = vmatpush.msra.mxu0 0.0
        %2027 = vmatpush.msra.mxu0 0.0
        %2028 = vmatpush.msra.mxu0 0.0
        %2029 = vmatpush.msra.mxu0 0.0
        %2030 = vmatpush.msra.mxu0 0.0
        %2031 = vmatpush.msra.mxu0 0.0
        %2032 = vmatpush.msra.mxu0 %v1994
        %2033 = vmatmul.f32.gmra.mxu0 %v2015
        %v2034 = vpop.f32.mrf.mxu0
        %v2035 = vadd.f32 %v2012, %v2034
        %2036 = vdwg.mxu0
        %s2037 = scalar_lea.vmem [#allocation4], 24
        %v2038 = vld [vmem:[%s2037] sm:$0xff]
        %2040 = vset.pattern.permute.xlu0 0
        %2041 = vperm.xlu0 %2040, %v1838
        %v2042 = vpop.permute.xlu0 %2041
        %v2044 = vmul.f32 %v2042, %v2038
        %v2045 = vadd.f32 %v2044, %v2035
        %2046 = vst.msk [vmem:[%s2037] sm:$0xff] %vm618, %v2045
        %2047 = vst.msk [vmem:[%s1830] sm:$0xff] %vm724, %v1835
        // Predicated region
        $region73: #{tpu_custom_call.1} parent=47 // pred_check
          %p2048 = pneg %p539
        $region74: #{tpu_custom_call.1} parent=47 // pred_check_branch
          %2050 = sbr.rel (%p2048) target = $region76
        $region75: #{tpu_custom_call.1} parent=47 // pred_region
          %v2051 = vld [vmem:[#allocation3] sm:$0xff]
          %v2052 = vld [vmem:[#allocation3 + $0x8] sm:$0xff]
          %v2053 = vld [vmem:[#allocation3 + $0x10] sm:$0xff]
          %v2054 = vld [vmem:[#allocation3 + $0x18] sm:$0xff]
          %v2055 = vrcp.pop %v2051
          %v2056 = vrcp.pop %v2052
          %v2057 = vrcp.pop %v2053
          %v2058 = vrcp.pop %v2054
          %v2059 = vld [vmem:[#allocation4] sm:$0xff]
          %2061 = vset.pattern.permute.xlu0 0
          %2062 = vperm.xlu0 %2061, %v2055
          %v2063 = vpop.permute.xlu0 %2062
          %v2065 = vmul.f32 %v2059, %v2063
          %v2066 = vld [vmem:[%s1279] sm:$0xff]
          %2068 = vset.pattern.permute.xlu0 0
          %2069 = vperm.xlu0 %2068, %v2056
          %v2070 = vpop.permute.xlu0 %2069
          %v2072 = vmul.f32 %v2066, %v2070
          %v2073 = vld [vmem:[%s1658] sm:$0xff]
          %2075 = vset.pattern.permute.xlu0 0
          %2076 = vperm.xlu0 %2075, %v2057
          %v2077 = vpop.permute.xlu0 %2076
          %v2079 = vmul.f32 %v2073, %v2077
          %v2080 = vld [vmem:[%s2037] sm:$0xff]
          %2082 = vset.pattern.permute.xlu0 0
          %2083 = vperm.xlu0 %2082, %v2058
          %v2084 = vpop.permute.xlu0 %2083
          %v2086 = vmul.f32 %v2080, %v2084
          %2088 = vrot.lane.b32.xlu0 %v2072, 8
          %v2089 = vpop.permute.xlu0 %2088
          %2092 = vrot.lane.b32.xlu0 %v2079, 16
          %v2093 = vpop.permute.xlu0 %2092
          %2096 = vrot.lane.b32.xlu0 %v2086, 24
          %v2097 = vpop.permute.xlu0 %2096
          %v2099 = vsel %vm618, %v2065, %v2089
          %vm2100 = vcmask 130048
          %v2101 = vsel %vm2100, %v2099, %v2093
          %vm2102 = vcmask 195584
          %v2103 = vsel %vm2102, %v2101, %v2097
          %vm2104 = vcmask 261120
          %2105 = vst.msk [vmem:[%s522] sm:$0xff] %vm2104, %v2103
        $region76: #{tpu_custom_call.1} parent=47 // pred_fallthru
          _
        %s2106 = sand.u32 %s259, 1
        %s2107 = scalar_lea.sflag [#allocation7], %s2106
        %s2108 = sand.u32 %s259, 1
        %s2109 = smul.addr %s2108, 8
        %s2110 = scalar_lea.vmem [#allocation14], %s2109
        // Predicated region
        $region77: #{tpu_custom_call.1} parent=47 // pred_check
          %p2111 = pneg %p269
        $region78: #{tpu_custom_call.1} parent=47 // pred_check_branch
          %2113 = sbr.rel (%p2111) target = $region80
        $region79: #{tpu_custom_call.1} parent=47 // pred_region
          %2115 = vsyncadd %s2107, 0
          %s2116 = sadd.s32 %s36, %s35
          %s2117 = smul.addr %s2116, 8
          %s2118 = scalar_lea.hbm %s7, %s2117
          %s2120 = sshll.u32 %s2110, 4
          %s2121 = int_to_ptr.vmem [resolvable:$true] %s2120
          %s2122 = sshll.u32 %s2118, 4
          %s2123 = int_to_ptr.hbm [resolvable:$true] %s2122
          %2125 = dma.vmem_to_hbm [thread:$0]  %s2121, 128, %s2123, %s2107
        $region80: #{tpu_custom_call.1} parent=47 // pred_fallthru
          _
      $region48: #{tpu_custom_call.1} parent=5 // pred_fallthru
        _
      %p2126 = scmp.le.s32.totalorder 2, %s25
      // Predicated region
      $region81: #{tpu_custom_call.1} parent=5 // pred_check
        %p2127 = pneg %p2126
      $region82: #{tpu_custom_call.1} parent=5 // pred_check_branch
        %2129 = sbr.rel (%p2127) target = $region84
      $region83: #{tpu_custom_call.1} parent=5 // pred_region
        %s2130 = ssub.s32 %s25, 2
        // Predicated region
        $region85: #{tpu_custom_call.1} parent=83 // pred_check
          %p2131 = pneg %p275
        $region86: #{tpu_custom_call.1} parent=83 // pred_check_branch
          %2133 = sbr.rel (%p2131) target = $region88
        $region87: #{tpu_custom_call.1} parent=83 // pred_region
          %s2134 = sand.u32 %s260, 1
          %s2135 = scalar_lea.sflag [#allocation7], %s2134
          %s2136 = sand.u32 %s260, 1
          %s2137 = smul.addr %s2136, 8
          %s2138 = scalar_lea.vmem [#allocation14], %s2137
          %2140 = dma.done %s2135, 128
        $region88: #{tpu_custom_call.1} parent=83 // pred_fallthru
          _
      $region84: #{tpu_custom_call.1} parent=5 // pred_fallthru
        _
    $region6: #{tpu_custom_call.1} parent=1 // loop_footer
      %s29 = sadd.s32 1, %s25
    $region7: #{tpu_custom_call.1} parent=1 // loop_footer_branch
      %24 = sbr.rel target = $region3
    $region8: #{tpu_custom_call.1} parent=1 // loop_exit
      _
    %2141 = vsyncpa [#allocation6], 1
    %s2142 = scalar_lea.sflag [#allocation6], 1
    %2143 = vsyncpa %s2142, 1
    %2144 = vsyncpa [#allocation9], 1
    %s2145 = scalar_lea.sflag [#allocation9], 1
    %2146 = vsyncpa %s2145, 1
    %2147 = vsyncpa [#allocation12], 1
    %s2148 = scalar_lea.sflag [#allocation12], 1
    %2149 = vsyncpa %s2148, 1
    %2150 = vsyncpa [#allocation7], 1
    %s2151 = scalar_lea.sflag [#allocation7], 1
    %2152 = vsyncpa %s2151, 1

</llo_original>
